<compile_context>
chip_gen: v5e
topology: v5e:2x2
jax: 0.10.0
libtpu: 0.0.40
codegen_flags: <defaults>
</compile_context>

<pallas_src>
import functools

import jax
import jax.numpy as jnp
from jax.experimental import pallas as pl
from jax.experimental.pallas import tpu as pltpu


def _unpool_kernel(x_ref, o_ref, *, stride, r, w):
    # x_ref: (TC, THb, r*W)            (size-1 batch dim squeezed by BlockSpec)
    # o_ref: (TC, THb, r*stride*W*stride)
    s = stride
    x = x_ref[...]
    tc, thb, _ = x.shape
    ws = w * s                 # lanes carrying data per folded input row
    row_out = ws * s           # total output lanes per folded input row

    # Lane zero-insertion for all r folded rows at once (input-scale work):
    #   xz[..., j*s] = x[..., j], every other lane 0.
    # TODO(synk): verify with pl.lower_as_mlir on v7x that jnp.repeat lowers to
    # an XLU interleave rather than a materialized relayout copy.
    up = jnp.repeat(x, s, axis=-1)                              # (TC, THb, r*W*s)
    lane = jax.lax.broadcasted_iota(jnp.int32, up.shape, 2)
    xz = jnp.where(lane % s == 0, up, jnp.zeros_like(up))

    # Assemble the full super-row and store it once (no double write):
    #   [ zi(row_0) | 0..0 | zi(row_1) | 0..0 | ... ]  with (s-1)*W*s zero lanes
    # after each zero-inserted row — those are output rows h*s+1 .. h*s+s-1.
    zero_gap = jnp.zeros((tc, thb, row_out - ws), dtype=o_ref.dtype)
    pieces = []
    for i in range(r):
        pieces.append(xz[:, :, i * ws:(i + 1) * ws].astype(o_ref.dtype))
        pieces.append(zero_gap)
    o_ref[...] = jnp.concatenate(pieces, axis=-1)


def _vmem_capacity_bytes():
    """Best-effort per-core VMEM capacity; conservative 64 MiB fallback (v7x)."""
    try:
        info = pltpu.get_tpu_info()
        for name in ("vmem_capacity_bytes", "vmem_size_bytes", "vmem_bytes"):
            v = getattr(info, name, None)
            if v:
                return int(v)
    except Exception:
        pass
    return 64 << 20


def _choose_row_fold(H, W, stride, max_fold=64):
    """Smallest r dividing H such that r*stride*W*stride is a multiple of 128."""
    row_out = stride * W * stride
    if row_out % 128 == 0:
        return 1
    for r in range(2, min(H, max_fold) + 1):
        if H % r == 0 and (r * row_out) % 128 == 0:
            return r
    return 1


def _choose_tiles(N, C, Hb, out_row_bytes, in_row_bytes, sub, budget_total):
    """Pick (tc, thb) channel / folded-row tile sizes.

    Budget covers double-buffering of both operands: 2*(in+out) <= budget_total.
    Bias toward larger thb first (longer contiguous HBM runs per DMA), then tc;
    then push toward >= 8 grid steps (megacore / dual-TC balance) as long as
    output tiles stay >= 256 KiB, and always toward >= 2 steps for overlap.
    """
    th_cands = sorted({d for d in range(sub, Hb + 1, sub) if Hb % d == 0} | {Hb})
    tc_cands = sorted(d for d in range(1, C + 1) if C % d == 0)
    per_row = 2 * (out_row_bytes + in_row_bytes)

    tc, thb = tc_cands[0], th_cands[0]
    best = (-1, -1)
    for h in th_cands:
        for c in tc_cands:
            if c * h * per_row <= budget_total and (h, c) > best:
                best = (h, c)
                thb, tc = h, c

    def steps(c, h):
        return N * (C // c) * (Hb // h)

    def shrink(cands, cur):
        smaller = [d for d in cands if d < cur]
        return max(smaller) if smaller else cur

    while steps(tc, thb) < 8:
        c2 = shrink(tc_cands, tc)
        if c2 != tc and c2 * thb * out_row_bytes >= (256 << 10):
            tc = c2
            continue
        h2 = shrink(th_cands, thb)
        if h2 != thb and tc * h2 * out_row_bytes >= (256 << 10):
            thb = h2
            continue
        break
    while steps(tc, thb) < 2:
        c2 = shrink(tc_cands, tc)
        if c2 != tc:
            tc = c2
            continue
        h2 = shrink(th_cands, thb)
        if h2 != thb:
            thb = h2
            continue
        break
    return tc, thb


def unpool(x, stride=2):
    """Equivalent of Unpool(in_channels=C, stride).forward(x) for NCHW x."""
    N, C, H, W = x.shape
    s = int(stride)
    if s == 1:  # 1x1 identity kernel with stride 1 -> identity
        return jnp.asarray(x)

    itemsize = jnp.dtype(x.dtype).itemsize
    sub = max(8, 32 // max(1, itemsize))  # sublane packing: 8 f32 / 16 bf16 / 32 i8

    # Fold r input rows into the lane axis so the output block is a dense,
    # 128-multiple lane slab (unmasked stores).  Both reshapes are free.
    r = _choose_row_fold(H, W, s)
    Hb = H // r
    lane_in = r * W
    lane_out = r * s * W * s

    cap = _vmem_capacity_bytes()
    budget_total = min(32 << 20, (cap * 5) // 8)
    tc, thb = _choose_tiles(
        N, C, Hb,
        out_row_bytes=lane_out * itemsize,
        in_row_bytes=lane_in * itemsize,
        sub=sub,
        budget_total=budget_total,
    )

    in_tile = tc * thb * lane_in * itemsize
    out_tile = tc * thb * lane_out * itemsize
    footprint = 2 * (in_tile + out_tile)            # double-buffered in + out
    vmem_limit = int(min(cap - (8 << 20), max(2 * footprint, 32 << 20)))

    grid = (N, C // tc, Hb // thb)
    x_folded = x.reshape(N, C, Hb, lane_in)          # free row-major reshape

    out = pl.pallas_call(
        functools.partial(_unpool_kernel, stride=s, r=r, w=W),
        out_shape=jax.ShapeDtypeStruct((N, C, Hb, lane_out), x.dtype),
        grid=grid,
        in_specs=[
            pl.BlockSpec((None, tc, thb, lane_in), lambda n, c, h: (n, c, h, 0)),
        ],
        out_specs=pl.BlockSpec(
            (None, tc, thb, lane_out), lambda n, c, h: (n, c, h, 0)
        ),
        compiler_params=pltpu.CompilerParams(
            dimension_semantics=("parallel", "parallel", "parallel"),
            vmem_limit_bytes=vmem_limit,
        ),
        cost_estimate=pl.CostEstimate(
            flops=0,
            transcendentals=0,
            bytes_accessed=(1 + s * s) * N * C * H * W * itemsize,
        ),
    )(x_folded)

    # Free row-major reshape: (N, C, Hb, r*s*W*s) -> (N, C, H*s, W*s).
    return out.reshape(N, C, H * s, W * s)


if __name__ == "__main__":
    key = jax.random.PRNGKey(0)
    N, C, H, W = 2, 4, 16, 16
    stride = 2

    x = jax.random.normal(key, (N, C, H, W), dtype=jnp.float32)

    out = jax.block_until_ready(unpool(x, stride=stride))

    # Reference: zero-insertion upsample (exactly what conv_transpose2d with
    # the one-hot depthwise weights computes).
    ref = jnp.zeros((N, C, H * stride, W * stride), dtype=x.dtype)
    ref = ref.at[:, :, ::stride, ::stride].set(x)

    assert out.shape == (N, C, H * stride, W * stride), out.shape
    assert out.dtype == x.dtype
    assert jnp.array_equal(out, ref), "mismatch vs reference"

    print("KERNEL_OK")
</pallas_src>

<mosaic_0001>
module attributes {stable_mosaic.version = 11 : i64} {
  func.func @_unpool_kernel(%arg0: i32, %arg1: i32, %arg2: i32, %arg3: memref<1x4x8x32xf32, #tpu.memory_space<vmem>>, %arg4: memref<1x4x8x128xf32, #tpu.memory_space<vmem>>) attributes {dimension_semantics = [#tpu.dimension_semantics<parallel>, #tpu.dimension_semantics<parallel>, #tpu.dimension_semantics<parallel>], iteration_bounds = array<i64: 2, 1, 1>, scalar_prefetch = 0 : i64, scratch_operands = 0 : i64, tpu.core_type = #tpu.core_type<tc>, window_params = [{transform_indices = @transform_0, window_bounds = array<i64: 1, 4, 8, 32>}, {transform_indices = @transform_1, window_bounds = array<i64: 1, 4, 8, 128>}]} {
    %c0 = arith.constant 0 : index
    %c0_0 = arith.constant 0 : index
    %c0_1 = arith.constant 0 : index
    %c0_2 = arith.constant 0 : index
    %0 = vector.load %arg3[%c0, %c0_0, %c0_1, %c0_2] : memref<1x4x8x32xf32, #tpu.memory_space<vmem>>, vector<1x4x8x32xf32>
    %1 = vector.shape_cast %0 : vector<1x4x8x32xf32> to vector<4x8x32xf32>
    %2 = vector.shape_cast %1 : vector<4x8x32xf32> to vector<4x8x32x1xf32>
    %3 = vector.broadcast %2 : vector<4x8x32x1xf32> to vector<4x8x32x2xf32>
    %4 = vector.shape_cast %3 : vector<4x8x32x2xf32> to vector<4x8x64xf32>
    %5 = tpu.iota {dimensions = array<i32: 2>} : vector<4x8x64xi32>
    %c2_i32 = arith.constant 2 : i32
    %c0_i32 = arith.constant 0 : i32
    %6 = arith.cmpi eq, %c2_i32, %c0_i32 : i32
    %c1_i32 = arith.constant 1 : i32
    %7 = arith.select %6, %c1_i32, %c2_i32 : i32
    %8 = vector.broadcast %7 : i32 to vector<4x8x64xi32>
    %9 = arith.remsi %5, %8 : vector<4x8x64xi32>
    %c0_i32_3 = arith.constant 0 : i32
    %10 = vector.broadcast %c0_i32_3 : i32 to vector<4x8x64xi32>
    %11 = arith.cmpi ne, %9, %10 : vector<4x8x64xi32>
    %c0_i32_4 = arith.constant 0 : i32
    %12 = vector.broadcast %c0_i32_4 : i32 to vector<4x8x64xi32>
    %13 = arith.cmpi slt, %9, %12 : vector<4x8x64xi32>
    %c0_i32_5 = arith.constant 0 : i32
    %14 = arith.cmpi slt, %7, %c0_i32_5 : i32
    %15 = vector.broadcast %14 : i1 to vector<4x8x64xi1>
    %16 = vector.broadcast %15 : vector<4x8x64xi1> to vector<4x8x64xi1>
    %17 = arith.xori %13, %16 : vector<4x8x64xi1>
    %18 = arith.andi %17, %11 : vector<4x8x64xi1>
    %19 = vector.broadcast %7 : i32 to vector<4x8x64xi32>
    %20 = arith.addi %9, %19 : vector<4x8x64xi32>
    %21 = arith.select %18, %20, %9 : vector<4x8x64xi1>, vector<4x8x64xi32>
    %c0_i32_6 = arith.constant 0 : i32
    %22 = vector.broadcast %c0_i32_6 : i32 to vector<4x8x64xi32>
    %23 = arith.cmpi eq, %21, %22 : vector<4x8x64xi32>
    %cst = arith.constant 0.000000e+00 : f32
    %24 = vector.broadcast %cst : f32 to vector<4x8x64xf32>
    %25 = arith.select %23, %4, %24 : vector<4x8x64xi1>, vector<4x8x64xf32>
    %cst_7 = arith.constant 0.000000e+00 : f32
    %26 = vector.broadcast %cst_7 : f32 to vector<4x8x32xf32>
    %27 = vector.extract_strided_slice %25 {offsets = [0, 0, 0], sizes = [4, 8, 32], strides = [1, 1, 1]} : vector<4x8x64xf32> to vector<4x8x32xf32>
    %28 = vector.extract_strided_slice %25 {offsets = [0, 0, 32], sizes = [4, 8, 32], strides = [1, 1, 1]} : vector<4x8x64xf32> to vector<4x8x32xf32>
    %29 = tpu.concatenate %27, %26, %28, %26 in 2 : vector<4x8x32xf32>, vector<4x8x32xf32>, vector<4x8x32xf32>, vector<4x8x32xf32> -> vector<4x8x128xf32>
    %c0_8 = arith.constant 0 : index
    %c0_9 = arith.constant 0 : index
    %c0_10 = arith.constant 0 : index
    %c0_11 = arith.constant 0 : index
    %30 = vector.load %arg4[%c0_8, %c0_9, %c0_10, %c0_11] : memref<1x4x8x128xf32, #tpu.memory_space<vmem>>, vector<1x4x8x128xf32>
    %31 = vector.shape_cast %30 : vector<1x4x8x128xf32> to vector<4x8x128xf32>
    %32 = vector.shape_cast %29 : vector<4x8x128xf32> to vector<1x4x8x128xf32>
    tpu.vector_store %arg4[%c0_8, %c0_9, %c0_10, %c0_11], %32 {strides = array<i32>} : memref<1x4x8x128xf32, #tpu.memory_space<vmem>>, vector<1x4x8x128xf32>,
    return
  }
  func.func @transform_0(%arg0: i32, %arg1: i32, %arg2: i32) -> (i32, i32, i32, i32) {
    %c0_i32 = arith.constant 0 : i32
    %c0_i32_0 = arith.constant 0 : i32
    return %arg0, %arg1, %arg2, %c0_i32 : i32, i32, i32, i32
  }
  func.func @transform_1(%arg0: i32, %arg1: i32, %arg2: i32) -> (i32, i32, i32, i32) {
    %c0_i32 = arith.constant 0 : i32
    %c0_i32_0 = arith.constant 0 : i32
    return %arg0, %arg1, %arg2, %c0_i32 : i32, i32, i32, i32
  }
}

</mosaic_0001>

<llo_original>
// kernel: tpu_custom_call.1
$region0: #{tpu_custom_call.1}
  #allocation0 [shape = 'u32[]', space=smem, size = 0x4, offset = 0x4, fixed_abs, tag = 'smem constant byte address 0x4 - core index']
  #allocation1 [shape = 'u32[72,128]{1,0:T(1,128)}', space=vmem, size = 0x9000, scoped, tag = 'internal scratch']
  %s0 = inlined_call_operand.hbm [shape: f32[2,4,8,32], index: 0, kind: input, shape index: {}]
  %s1 = inlined_call_operand.hbm [shape: f32[2,4,8,128], index: 1, kind: output, shape index: {}]
  %s2 = sld [smem:[#allocation0]]
  $region41: #{tpu_custom_call.1} parent=0
    _
  %s4 = ssub.s32 1, %s2
  %s5 = scalar_select 0, %s4, %s2
  $region1: #{tpu_custom_call.1} parent=0
    #allocation2 [shape = 'u8[32768]{0}', space=vmem, size = 0x8000, scoped, tag = 'input window, operand 0']
    #allocation3 [shape = 's32[2]{0}', space=sflag, size = 0x8, scoped, tag = 'scoped memory for tpu_custom_call.1']
    #allocation4 [shape = 's32[2]{0}', space=sflag, size = 0x8, scoped, tag = 'scoped memory for tpu_custom_call.1']
    #allocation5 [shape = 'u8[32768]{0}', space=vmem, size = 0x8000, scoped, tag = 'output window, operand 0']
    %6 = vsyncpa [#allocation3], 0
    %s7 = scalar_lea.sflag [#allocation3], 1
    %8 = vsyncpa %s7, 0
    %9 = vsyncpa [#allocation4], 0
    %s10 = scalar_lea.sflag [#allocation4], 1
    %11 = vsyncpa %s10, 0
    loop: start=0, step=1, limit=4
    $region2: #{tpu_custom_call.1} parent=1 // loop_pre_header
      _
    $region3: #{tpu_custom_call.1} parent=1 // loop_header
      %s13 = sphi 0, %s17
      %p14 = scmp.ge.s32.totalorder %s13, 4
      %s20 = sphi 0, %s39
      %s21 = sphi 0, %s35
      %s22 = sphi 0, %s31
      %s23 = sphi 0, %s20
      %s24 = sphi 0, %s21
      %s25 = sphi 0, %s22
      %s26 = sphi 0, %s23
      %s27 = sphi 0, %s24
      %s28 = sphi 0, %s25
      %s46 = sphi 0, %s48
      %s49 = sphi 0, %s46
      %s50 = sphi 0, %s49
      %s66 = sphi 0, %s50
      %s76 = sphi 0, %s78
      %s79 = sphi 0, %s76
      %s80 = sphi 0, %s79
      %s96 = sphi 0, %s80
    $region4: #{tpu_custom_call.1} parent=1 // loop_header_branch
      %16 = sbr.rel (%p14) target = $region8
    $region5: #{tpu_custom_call.1} parent=1 // loop_body
      %s18 = ssub.s32 %s13, 1
      %s19 = ssub.s32 %s13, 2
      %s29 = sadd.s32 1, %s22
      %p30 = scmp.ge.s32.totalorder %s29, 1
      %s31 = scalar_select %p30, 0, %s29
      %s32 = sadd.s32 1, %s21
      %s33 = scalar_select %p30, %s32, %s21
      %p34 = scmp.ge.s32.totalorder %s33, 1
      %s35 = scalar_select %p34, 0, %s33
      %s36 = sadd.s32 1, %s20
      %s37 = scalar_select %p34, %s36, %s20
      %p38 = scmp.ge.s32.totalorder %s37, 2
      %s39 = scalar_select %p38, 0, %s37
      %s40 = ssub.s32 %s20, %s39
      %s41 = ssub.s32 %s21, %s35
      %s42 = sor.u32 %s40, %s41
      %s43 = ssub.s32 %s22, %s31
      %s44 = sor.u32 %s42, %s43
      %p45 = scmp.eq.s32.totalorder %s44, 0
      %s47 = sadd.s32 %s46, 1
      %s48 = scalar_select %p45, %s46, %s47
      %p51 = pneg %p45
      %p52 = scmp.eq.s32.totalorder %s13, 1
      %p53 = por %p51, %p52
      %p54 = scmp.ne.s32.totalorder %s46, %s49
      %p55 = scmp.eq.s32.totalorder %s13, 0
      %p56 = por %p54, %p55
      %p57 = scmp.ne.s32.totalorder %s46, %s49
      %p58 = scmp.eq.s32.totalorder %s18, 1
      %p59 = por %p57, %p58
      %p60 = scmp.ne.s32.totalorder %s49, %s50
      %p61 = scmp.eq.s32.totalorder %s18, 0
      %p62 = por %p60, %p61
      %p63 = scmp.ne.s32.totalorder %s49, %s50
      %p64 = scmp.eq.s32.totalorder %s19, 1
      %p65 = por %p63, %p64
      %p67 = scmp.ne.s32.totalorder %s50, %s66
      %p68 = scmp.eq.s32.totalorder %s19, 0
      %p69 = por %p67, %p68
      %s70 = ssub.s32 %s20, %s39
      %s71 = ssub.s32 %s21, %s35
      %s72 = sor.u32 %s70, %s71
      %s73 = ssub.s32 %s22, %s31
      %s74 = sor.u32 %s72, %s73
      %p75 = scmp.eq.s32.totalorder %s74, 0
      %s77 = sadd.s32 %s76, 1
      %s78 = scalar_select %p75, %s76, %s77
      %p81 = pneg %p75
      %p82 = scmp.eq.s32.totalorder %s13, 1
      %p83 = por %p81, %p82
      %p84 = scmp.ne.s32.totalorder %s76, %s79
      %p85 = scmp.eq.s32.totalorder %s13, 0
      %p86 = por %p84, %p85
      %p87 = scmp.ne.s32.totalorder %s76, %s79
      %p88 = scmp.eq.s32.totalorder %s18, 1
      %p89 = por %p87, %p88
      %p90 = scmp.ne.s32.totalorder %s79, %s80
      %p91 = scmp.eq.s32.totalorder %s18, 0
      %p92 = por %p90, %p91
      %p93 = scmp.ne.s32.totalorder %s79, %s80
      %p94 = scmp.eq.s32.totalorder %s19, 1
      %p95 = por %p93, %p94
      %p97 = scmp.ne.s32.totalorder %s80, %s96
      %p98 = scmp.eq.s32.totalorder %s19, 0
      %p99 = por %p97, %p98
      %p100 = scmp.le.s32.totalorder 1, %s13
      %p101 = scmp.lt.s32.totalorder %s13, 3
      %p102 = pnand %p100, %p101
      %p103 = pneg %p102
      // Predicated region
      $region9: #{tpu_custom_call.1} parent=5 // pred_check
        _
      $region10: #{tpu_custom_call.1} parent=5 // pred_check_branch
        %105 = sbr.rel (%p102) target = $region12
      $region11: #{tpu_custom_call.1} parent=5 // pred_region
        %s106 = ssub.s32 %s13, 1
      $region12: #{tpu_custom_call.1} parent=5 // pred_fallthru
        _
      %p107 = scmp.lt.s32.totalorder %s13, 2
      // Predicated region
      $region13: #{tpu_custom_call.1} parent=5 // pred_check
        %p108 = pneg %p107
      $region14: #{tpu_custom_call.1} parent=5 // pred_check_branch
        %110 = sbr.rel (%p108) target = $region16
      $region15: #{tpu_custom_call.1} parent=5 // pred_region
        // Predicated region
        $region17: #{tpu_custom_call.1} parent=15 // pred_check
          %p111 = pneg %p56
        $region18: #{tpu_custom_call.1} parent=15 // pred_check_branch
          %113 = sbr.rel (%p111) target = $region20
        $region19: #{tpu_custom_call.1} parent=15 // pred_region
          %s114 = sand.u32 %s46, 1
          %s115 = scalar_lea.sflag [#allocation3], %s114
          %s116 = sand.u32 %s46, 1
          %s117 = smul.addr %s116, 32
          %s118 = scalar_lea.vmem [#allocation2], %s117
          %s119 = smul.u32 4, %s21
          %121 = vsyncadd %s115, 0
          %s122 = sadd.s32 %s22, %s119
          %s123 = smul.addr %s20, 4
          %s124 = sadd.s32 %s122, %s123
          %s125 = smul.addr %s124, 8
          %s126 = scalar_lea.hbm %s0, %s125
          %s127 = sshll.u32 %s126, 4
          %s128 = int_to_ptr.hbm [resolvable:$true] %s127
          %s129 = sshll.u32 %s118, 4
          %s130 = int_to_ptr.vmem [resolvable:$true] %s129
          %135 = dma.hbm_to_vmem [thread:$0]  %s128, 512, %s130, %s115, 128, 128, 8
        $region20: #{tpu_custom_call.1} parent=15 // pred_fallthru
          _
      $region16: #{tpu_custom_call.1} parent=5 // pred_fallthru
        _
      %p136 = scmp.le.s32.totalorder 1, %s13
      %p137 = scmp.lt.s32.totalorder %s13, 3
      %p138 = pnand %p136, %p137
      %p139 = pneg %p138
      // Predicated region
      $region21: #{tpu_custom_call.1} parent=5 // pred_check
        _
      $region22: #{tpu_custom_call.1} parent=5 // pred_check_branch
        %141 = sbr.rel (%p138) target = $region24
      $region23: #{tpu_custom_call.1} parent=5 // pred_region
        %s142 = ssub.s32 %s13, 1
        %s143 = sand.u32 %s49, 1
        %s144 = scalar_lea.sflag [#allocation3], %s143
        %s145 = sand.u32 %s49, 1
        %s146 = smul.addr %s145, 32
        %s147 = scalar_lea.vmem [#allocation2], %s146
        // Predicated region
        $region25: #{tpu_custom_call.1} parent=23 // pred_check
          %p148 = pneg %p62
        $region26: #{tpu_custom_call.1} parent=23 // pred_check_branch
          %150 = sbr.rel (%p148) target = $region28
        $region27: #{tpu_custom_call.1} parent=23 // pred_region
          %152 = dma.done %s144, 512
        $region28: #{tpu_custom_call.1} parent=23 // pred_fallthru
          _
        %s153 = sand.u32 %s49, 1
        %s154 = scalar_lea.sflag [#allocation3], %s153
        %s155 = sand.u32 %s49, 1
        %s156 = smul.addr %s155, 32
        %s157 = scalar_lea.vmem [#allocation2], %s156
        %p158 = pneg %p62
        %p159 = pneg %p59
        %p160 = pneg %p92
        %p161 = pneg %p89
        %s162 = sand.u32 %s79, 1
        %s163 = scalar_lea.sflag [#allocation4], %s162
        %s164 = sand.u32 %s79, 1
        %s165 = smul.addr %s164, 32
        %s166 = scalar_lea.vmem [#allocation5], %s165
        %s167 = smul.u32 4, %s24
        %s168 = smul.u32 4, %s24
        %v169 = vld [vmem:[%s147] sm:$0xff]
        %v170 = vld [vmem:[%s147 + $0x8] sm:$0xff]
        %v171 = vld [vmem:[%s147 + $0x10] sm:$0xff]
        %v172 = vld [vmem:[%s147 + $0x18] sm:$0xff]
        %v173 = vperm.slane %v169, 0
        %v174 = vlaneseq
        %v175 = vshrl.u32 %v174, 7
        %177 = vset.pattern.permute.xlu0 %v175
        %178 = vperm.xlu0 %177, %v173
        %v179 = vpop.permute.xlu0 %178
        %v180 = vlaneseq
        %v181 = vshrl.u32 %v180, 7
        %v182 = vadd.s32 %v181, 8
        %183 = vset.pattern.permute.xlu0 %v182
        %184 = vperm.xlu0 %183, %v173
        %v185 = vpop.permute.xlu0 %184
        %v186 = vlaneseq
        %v187 = vshrl.u32 %v186, 7
        %v188 = vadd.s32 %v187, 16
        %189 = vset.pattern.permute.xlu0 %v188
        %190 = vperm.xlu0 %189, %v173
        %v191 = vpop.permute.xlu0 %190
        %v192 = vlaneseq
        %v193 = vshrl.u32 %v192, 7
        %v194 = vadd.s32 %v193, 24
        %195 = vset.pattern.permute.xlu0 %v194
        %196 = vperm.xlu0 %195, %v173
        %v197 = vpop.permute.xlu0 %196
        %v198 = vperm.slane %v169, 1
        %v199 = vlaneseq
        %v200 = vshrl.u32 %v199, 7
        %202 = vset.pattern.permute.xlu0 %v200
        %203 = vperm.xlu0 %202, %v198
        %v204 = vpop.permute.xlu0 %203
        %v205 = vlaneseq
        %v206 = vshrl.u32 %v205, 7
        %v207 = vadd.s32 %v206, 8
        %208 = vset.pattern.permute.xlu0 %v207
        %209 = vperm.xlu0 %208, %v198
        %v210 = vpop.permute.xlu0 %209
        %v211 = vlaneseq
        %v212 = vshrl.u32 %v211, 7
        %v213 = vadd.s32 %v212, 16
        %214 = vset.pattern.permute.xlu0 %v213
        %215 = vperm.xlu0 %214, %v198
        %v216 = vpop.permute.xlu0 %215
        %v217 = vlaneseq
        %v218 = vshrl.u32 %v217, 7
        %v219 = vadd.s32 %v218, 24
        %220 = vset.pattern.permute.xlu0 %v219
        %221 = vperm.xlu0 %220, %v198
        %v222 = vpop.permute.xlu0 %221
        %v223 = vperm.slane %v169, 2
        %v224 = vlaneseq
        %v225 = vshrl.u32 %v224, 7
        %227 = vset.pattern.permute.xlu0 %v225
        %228 = vperm.xlu0 %227, %v223
        %v229 = vpop.permute.xlu0 %228
        %v230 = vlaneseq
        %v231 = vshrl.u32 %v230, 7
        %v232 = vadd.s32 %v231, 8
        %233 = vset.pattern.permute.xlu0 %v232
        %234 = vperm.xlu0 %233, %v223
        %v235 = vpop.permute.xlu0 %234
        %v236 = vlaneseq
        %v237 = vshrl.u32 %v236, 7
        %v238 = vadd.s32 %v237, 16
        %239 = vset.pattern.permute.xlu0 %v238
        %240 = vperm.xlu0 %239, %v223
        %v241 = vpop.permute.xlu0 %240
        %v242 = vlaneseq
        %v243 = vshrl.u32 %v242, 7
        %v244 = vadd.s32 %v243, 24
        %245 = vset.pattern.permute.xlu0 %v244
        %246 = vperm.xlu0 %245, %v223
        %v247 = vpop.permute.xlu0 %246
        %v248 = vperm.slane %v169, 3
        %v249 = vlaneseq
        %v250 = vshrl.u32 %v249, 7
        %252 = vset.pattern.permute.xlu0 %v250
        %253 = vperm.xlu0 %252, %v248
        %v254 = vpop.permute.xlu0 %253
        %v255 = vlaneseq
        %v256 = vshrl.u32 %v255, 7
        %v257 = vadd.s32 %v256, 8
        %258 = vset.pattern.permute.xlu0 %v257
        %259 = vperm.xlu0 %258, %v248
        %v260 = vpop.permute.xlu0 %259
        %v261 = vlaneseq
        %v262 = vshrl.u32 %v261, 7
        %v263 = vadd.s32 %v262, 16
        %264 = vset.pattern.permute.xlu0 %v263
        %265 = vperm.xlu0 %264, %v248
        %v266 = vpop.permute.xlu0 %265
        %v267 = vlaneseq
        %v268 = vshrl.u32 %v267, 7
        %v269 = vadd.s32 %v268, 24
        %270 = vset.pattern.permute.xlu0 %v269
        %271 = vperm.xlu0 %270, %v248
        %v272 = vpop.permute.xlu0 %271
        %v273 = vperm.slane %v169, 4
        %v274 = vlaneseq
        %v275 = vshrl.u32 %v274, 7
        %277 = vset.pattern.permute.xlu0 %v275
        %278 = vperm.xlu0 %277, %v273
        %v279 = vpop.permute.xlu0 %278
        %v280 = vlaneseq
        %v281 = vshrl.u32 %v280, 7
        %v282 = vadd.s32 %v281, 8
        %283 = vset.pattern.permute.xlu0 %v282
        %284 = vperm.xlu0 %283, %v273
        %v285 = vpop.permute.xlu0 %284
        %v286 = vlaneseq
        %v287 = vshrl.u32 %v286, 7
        %v288 = vadd.s32 %v287, 16
        %289 = vset.pattern.permute.xlu0 %v288
        %290 = vperm.xlu0 %289, %v273
        %v291 = vpop.permute.xlu0 %290
        %v292 = vlaneseq
        %v293 = vshrl.u32 %v292, 7
        %v294 = vadd.s32 %v293, 24
        %295 = vset.pattern.permute.xlu0 %v294
        %296 = vperm.xlu0 %295, %v273
        %v297 = vpop.permute.xlu0 %296
        %v298 = vperm.slane %v169, 5
        %v299 = vlaneseq
        %v300 = vshrl.u32 %v299, 7
        %302 = vset.pattern.permute.xlu0 %v300
        %303 = vperm.xlu0 %302, %v298
        %v304 = vpop.permute.xlu0 %303
        %v305 = vlaneseq
        %v306 = vshrl.u32 %v305, 7
        %v307 = vadd.s32 %v306, 8
        %308 = vset.pattern.permute.xlu0 %v307
        %309 = vperm.xlu0 %308, %v298
        %v310 = vpop.permute.xlu0 %309
        %v311 = vlaneseq
        %v312 = vshrl.u32 %v311, 7
        %v313 = vadd.s32 %v312, 16
        %314 = vset.pattern.permute.xlu0 %v313
        %315 = vperm.xlu0 %314, %v298
        %v316 = vpop.permute.xlu0 %315
        %v317 = vlaneseq
        %v318 = vshrl.u32 %v317, 7
        %v319 = vadd.s32 %v318, 24
        %320 = vset.pattern.permute.xlu0 %v319
        %321 = vperm.xlu0 %320, %v298
        %v322 = vpop.permute.xlu0 %321
        %v323 = vperm.slane %v169, 6
        %v324 = vlaneseq
        %v325 = vshrl.u32 %v324, 7
        %327 = vset.pattern.permute.xlu0 %v325
        %328 = vperm.xlu0 %327, %v323
        %v329 = vpop.permute.xlu0 %328
        %v330 = vlaneseq
        %v331 = vshrl.u32 %v330, 7
        %v332 = vadd.s32 %v331, 8
        %333 = vset.pattern.permute.xlu0 %v332
        %334 = vperm.xlu0 %333, %v323
        %v335 = vpop.permute.xlu0 %334
        %v336 = vlaneseq
        %v337 = vshrl.u32 %v336, 7
        %v338 = vadd.s32 %v337, 16
        %339 = vset.pattern.permute.xlu0 %v338
        %340 = vperm.xlu0 %339, %v323
        %v341 = vpop.permute.xlu0 %340
        %v342 = vlaneseq
        %v343 = vshrl.u32 %v342, 7
        %v344 = vadd.s32 %v343, 24
        %345 = vset.pattern.permute.xlu0 %v344
        %346 = vperm.xlu0 %345, %v323
        %v347 = vpop.permute.xlu0 %346
        %v348 = vperm.slane %v169, 7
        %v349 = vlaneseq
        %v350 = vshrl.u32 %v349, 7
        %352 = vset.pattern.permute.xlu0 %v350
        %353 = vperm.xlu0 %352, %v348
        %v354 = vpop.permute.xlu0 %353
        %v355 = vlaneseq
        %v356 = vshrl.u32 %v355, 7
        %v357 = vadd.s32 %v356, 8
        %358 = vset.pattern.permute.xlu0 %v357
        %359 = vperm.xlu0 %358, %v348
        %v360 = vpop.permute.xlu0 %359
        %v361 = vlaneseq
        %v362 = vshrl.u32 %v361, 7
        %v363 = vadd.s32 %v362, 16
        %364 = vset.pattern.permute.xlu0 %v363
        %365 = vperm.xlu0 %364, %v348
        %v366 = vpop.permute.xlu0 %365
        %v367 = vlaneseq
        %v368 = vshrl.u32 %v367, 7
        %v369 = vadd.s32 %v368, 24
        %370 = vset.pattern.permute.xlu0 %v369
        %371 = vperm.xlu0 %370, %v348
        %v372 = vpop.permute.xlu0 %371
        %v373 = vperm.slane %v170, 0
        %v374 = vlaneseq
        %v375 = vshrl.u32 %v374, 7
        %377 = vset.pattern.permute.xlu0 %v375
        %378 = vperm.xlu0 %377, %v373
        %v379 = vpop.permute.xlu0 %378
        %v380 = vlaneseq
        %v381 = vshrl.u32 %v380, 7
        %v382 = vadd.s32 %v381, 8
        %383 = vset.pattern.permute.xlu0 %v382
        %384 = vperm.xlu0 %383, %v373
        %v385 = vpop.permute.xlu0 %384
        %v386 = vlaneseq
        %v387 = vshrl.u32 %v386, 7
        %v388 = vadd.s32 %v387, 16
        %389 = vset.pattern.permute.xlu0 %v388
        %390 = vperm.xlu0 %389, %v373
        %v391 = vpop.permute.xlu0 %390
        %v392 = vlaneseq
        %v393 = vshrl.u32 %v392, 7
        %v394 = vadd.s32 %v393, 24
        %395 = vset.pattern.permute.xlu0 %v394
        %396 = vperm.xlu0 %395, %v373
        %v397 = vpop.permute.xlu0 %396
        %v398 = vperm.slane %v170, 1
        %v399 = vlaneseq
        %v400 = vshrl.u32 %v399, 7
        %402 = vset.pattern.permute.xlu0 %v400
        %403 = vperm.xlu0 %402, %v398
        %v404 = vpop.permute.xlu0 %403
        %v405 = vlaneseq
        %v406 = vshrl.u32 %v405, 7
        %v407 = vadd.s32 %v406, 8
        %408 = vset.pattern.permute.xlu0 %v407
        %409 = vperm.xlu0 %408, %v398
        %v410 = vpop.permute.xlu0 %409
        %v411 = vlaneseq
        %v412 = vshrl.u32 %v411, 7
        %v413 = vadd.s32 %v412, 16
        %414 = vset.pattern.permute.xlu0 %v413
        %415 = vperm.xlu0 %414, %v398
        %v416 = vpop.permute.xlu0 %415
        %v417 = vlaneseq
        %v418 = vshrl.u32 %v417, 7
        %v419 = vadd.s32 %v418, 24
        %420 = vset.pattern.permute.xlu0 %v419
        %421 = vperm.xlu0 %420, %v398
        %v422 = vpop.permute.xlu0 %421
        %v423 = vperm.slane %v170, 2
        %v424 = vlaneseq
        %v425 = vshrl.u32 %v424, 7
        %427 = vset.pattern.permute.xlu0 %v425
        %428 = vperm.xlu0 %427, %v423
        %v429 = vpop.permute.xlu0 %428
        %v430 = vlaneseq
        %v431 = vshrl.u32 %v430, 7
        %v432 = vadd.s32 %v431, 8
        %433 = vset.pattern.permute.xlu0 %v432
        %434 = vperm.xlu0 %433, %v423
        %v435 = vpop.permute.xlu0 %434
        %v436 = vlaneseq
        %v437 = vshrl.u32 %v436, 7
        %v438 = vadd.s32 %v437, 16
        %439 = vset.pattern.permute.xlu0 %v438
        %440 = vperm.xlu0 %439, %v423
        %v441 = vpop.permute.xlu0 %440
        %v442 = vlaneseq
        %v443 = vshrl.u32 %v442, 7
        %v444 = vadd.s32 %v443, 24
        %445 = vset.pattern.permute.xlu0 %v444
        %446 = vperm.xlu0 %445, %v423
        %v447 = vpop.permute.xlu0 %446
        %v448 = vperm.slane %v170, 3
        %v449 = vlaneseq
        %v450 = vshrl.u32 %v449, 7
        %452 = vset.pattern.permute.xlu0 %v450
        %453 = vperm.xlu0 %452, %v448
        %v454 = vpop.permute.xlu0 %453
        %v455 = vlaneseq
        %v456 = vshrl.u32 %v455, 7
        %v457 = vadd.s32 %v456, 8
        %458 = vset.pattern.permute.xlu0 %v457
        %459 = vperm.xlu0 %458, %v448
        %v460 = vpop.permute.xlu0 %459
        %v461 = vlaneseq
        %v462 = vshrl.u32 %v461, 7
        %v463 = vadd.s32 %v462, 16
        %464 = vset.pattern.permute.xlu0 %v463
        %465 = vperm.xlu0 %464, %v448
        %v466 = vpop.permute.xlu0 %465
        %v467 = vlaneseq
        %v468 = vshrl.u32 %v467, 7
        %v469 = vadd.s32 %v468, 24
        %470 = vset.pattern.permute.xlu0 %v469
        %471 = vperm.xlu0 %470, %v448
        %v472 = vpop.permute.xlu0 %471
        %v473 = vperm.slane %v170, 4
        %v474 = vlaneseq
        %v475 = vshrl.u32 %v474, 7
        %477 = vset.pattern.permute.xlu0 %v475
        %478 = vperm.xlu0 %477, %v473
        %v479 = vpop.permute.xlu0 %478
        %v480 = vlaneseq
        %v481 = vshrl.u32 %v480, 7
        %v482 = vadd.s32 %v481, 8
        %483 = vset.pattern.permute.xlu0 %v482
        %484 = vperm.xlu0 %483, %v473
        %v485 = vpop.permute.xlu0 %484
        %v486 = vlaneseq
        %v487 = vshrl.u32 %v486, 7
        %v488 = vadd.s32 %v487, 16
        %489 = vset.pattern.permute.xlu0 %v488
        %490 = vperm.xlu0 %489, %v473
        %v491 = vpop.permute.xlu0 %490
        %v492 = vlaneseq
        %v493 = vshrl.u32 %v492, 7
        %v494 = vadd.s32 %v493, 24
        %495 = vset.pattern.permute.xlu0 %v494
        %496 = vperm.xlu0 %495, %v473
        %v497 = vpop.permute.xlu0 %496
        %v498 = vperm.slane %v170, 5
        %v499 = vlaneseq
        %v500 = vshrl.u32 %v499, 7
        %502 = vset.pattern.permute.xlu0 %v500
        %503 = vperm.xlu0 %502, %v498
        %v504 = vpop.permute.xlu0 %503
        %v505 = vlaneseq
        %v506 = vshrl.u32 %v505, 7
        %v507 = vadd.s32 %v506, 8
        %508 = vset.pattern.permute.xlu0 %v507
        %509 = vperm.xlu0 %508, %v498
        %v510 = vpop.permute.xlu0 %509
        %v511 = vlaneseq
        %v512 = vshrl.u32 %v511, 7
        %v513 = vadd.s32 %v512, 16
        %514 = vset.pattern.permute.xlu0 %v513
        %515 = vperm.xlu0 %514, %v498
        %v516 = vpop.permute.xlu0 %515
        %v517 = vlaneseq
        %v518 = vshrl.u32 %v517, 7
        %v519 = vadd.s32 %v518, 24
        %520 = vset.pattern.permute.xlu0 %v519
        %521 = vperm.xlu0 %520, %v498
        %v522 = vpop.permute.xlu0 %521
        %v523 = vperm.slane %v170, 6
        %v524 = vlaneseq
        %v525 = vshrl.u32 %v524, 7
        %527 = vset.pattern.permute.xlu0 %v525
        %528 = vperm.xlu0 %527, %v523
        %v529 = vpop.permute.xlu0 %528
        %v530 = vlaneseq
        %v531 = vshrl.u32 %v530, 7
        %v532 = vadd.s32 %v531, 8
        %533 = vset.pattern.permute.xlu0 %v532
        %534 = vperm.xlu0 %533, %v523
        %v535 = vpop.permute.xlu0 %534
        %v536 = vlaneseq
        %v537 = vshrl.u32 %v536, 7
        %v538 = vadd.s32 %v537, 16
        %539 = vset.pattern.permute.xlu0 %v538
        %540 = vperm.xlu0 %539, %v523
        %v541 = vpop.permute.xlu0 %540
        %v542 = vlaneseq
        %v543 = vshrl.u32 %v542, 7
        %v544 = vadd.s32 %v543, 24
        %545 = vset.pattern.permute.xlu0 %v544
        %546 = vperm.xlu0 %545, %v523
        %v547 = vpop.permute.xlu0 %546
        %v548 = vperm.slane %v170, 7
        %v549 = vlaneseq
        %v550 = vshrl.u32 %v549, 7
        %552 = vset.pattern.permute.xlu0 %v550
        %553 = vperm.xlu0 %552, %v548
        %v554 = vpop.permute.xlu0 %553
        %v555 = vlaneseq
        %v556 = vshrl.u32 %v555, 7
        %v557 = vadd.s32 %v556, 8
        %558 = vset.pattern.permute.xlu0 %v557
        %559 = vperm.xlu0 %558, %v548
        %v560 = vpop.permute.xlu0 %559
        %v561 = vlaneseq
        %v562 = vshrl.u32 %v561, 7
        %v563 = vadd.s32 %v562, 16
        %564 = vset.pattern.permute.xlu0 %v563
        %565 = vperm.xlu0 %564, %v548
        %v566 = vpop.permute.xlu0 %565
        %v567 = vlaneseq
        %v568 = vshrl.u32 %v567, 7
        %v569 = vadd.s32 %v568, 24
        %570 = vset.pattern.permute.xlu0 %v569
        %571 = vperm.xlu0 %570, %v548
        %v572 = vpop.permute.xlu0 %571
        %v573 = vperm.slane %v171, 0
        %v574 = vlaneseq
        %v575 = vshrl.u32 %v574, 7
        %577 = vset.pattern.permute.xlu0 %v575
        %578 = vperm.xlu0 %577, %v573
        %v579 = vpop.permute.xlu0 %578
        %v580 = vlaneseq
        %v581 = vshrl.u32 %v580, 7
        %v582 = vadd.s32 %v581, 8
        %583 = vset.pattern.permute.xlu0 %v582
        %584 = vperm.xlu0 %583, %v573
        %v585 = vpop.permute.xlu0 %584
        %v586 = vlaneseq
        %v587 = vshrl.u32 %v586, 7
        %v588 = vadd.s32 %v587, 16
        %589 = vset.pattern.permute.xlu0 %v588
        %590 = vperm.xlu0 %589, %v573
        %v591 = vpop.permute.xlu0 %590
        %v592 = vlaneseq
        %v593 = vshrl.u32 %v592, 7
        %v594 = vadd.s32 %v593, 24
        %595 = vset.pattern.permute.xlu0 %v594
        %596 = vperm.xlu0 %595, %v573
        %v597 = vpop.permute.xlu0 %596
        %v598 = vperm.slane %v171, 1
        %v599 = vlaneseq
        %v600 = vshrl.u32 %v599, 7
        %602 = vset.pattern.permute.xlu0 %v600
        %603 = vperm.xlu0 %602, %v598
        %v604 = vpop.permute.xlu0 %603
        %v605 = vlaneseq
        %v606 = vshrl.u32 %v605, 7
        %v607 = vadd.s32 %v606, 8
        %608 = vset.pattern.permute.xlu0 %v607
        %609 = vperm.xlu0 %608, %v598
        %v610 = vpop.permute.xlu0 %609
        %v611 = vlaneseq
        %v612 = vshrl.u32 %v611, 7
        %v613 = vadd.s32 %v612, 16
        %614 = vset.pattern.permute.xlu0 %v613
        %615 = vperm.xlu0 %614, %v598
        %v616 = vpop.permute.xlu0 %615
        %v617 = vlaneseq
        %v618 = vshrl.u32 %v617, 7
        %v619 = vadd.s32 %v618, 24
        %620 = vset.pattern.permute.xlu0 %v619
        %621 = vperm.xlu0 %620, %v598
        %v622 = vpop.permute.xlu0 %621
        %v623 = vperm.slane %v171, 2
        %v624 = vlaneseq
        %v625 = vshrl.u32 %v624, 7
        %627 = vset.pattern.permute.xlu0 %v625
        %628 = vperm.xlu0 %627, %v623
        %v629 = vpop.permute.xlu0 %628
        %v630 = vlaneseq
        %v631 = vshrl.u32 %v630, 7
        %v632 = vadd.s32 %v631, 8
        %633 = vset.pattern.permute.xlu0 %v632
        %634 = vperm.xlu0 %633, %v623
        %v635 = vpop.permute.xlu0 %634
        %v636 = vlaneseq
        %v637 = vshrl.u32 %v636, 7
        %v638 = vadd.s32 %v637, 16
        %639 = vset.pattern.permute.xlu0 %v638
        %640 = vperm.xlu0 %639, %v623
        %v641 = vpop.permute.xlu0 %640
        %v642 = vlaneseq
        %v643 = vshrl.u32 %v642, 7
        %v644 = vadd.s32 %v643, 24
        %645 = vset.pattern.permute.xlu0 %v644
        %646 = vperm.xlu0 %645, %v623
        %v647 = vpop.permute.xlu0 %646
        %v648 = vperm.slane %v171, 3
        %v649 = vlaneseq
        %v650 = vshrl.u32 %v649, 7
        %652 = vset.pattern.permute.xlu0 %v650
        %653 = vperm.xlu0 %652, %v648
        %v654 = vpop.permute.xlu0 %653
        %v655 = vlaneseq
        %v656 = vshrl.u32 %v655, 7
        %v657 = vadd.s32 %v656, 8
        %658 = vset.pattern.permute.xlu0 %v657
        %659 = vperm.xlu0 %658, %v648
        %v660 = vpop.permute.xlu0 %659
        %v661 = vlaneseq
        %v662 = vshrl.u32 %v661, 7
        %v663 = vadd.s32 %v662, 16
        %664 = vset.pattern.permute.xlu0 %v663
        %665 = vperm.xlu0 %664, %v648
        %v666 = vpop.permute.xlu0 %665
        %v667 = vlaneseq
        %v668 = vshrl.u32 %v667, 7
        %v669 = vadd.s32 %v668, 24
        %670 = vset.pattern.permute.xlu0 %v669
        %671 = vperm.xlu0 %670, %v648
        %v672 = vpop.permute.xlu0 %671
        %v673 = vperm.slane %v171, 4
        %v674 = vlaneseq
        %v675 = vshrl.u32 %v674, 7
        %677 = vset.pattern.permute.xlu0 %v675
        %678 = vperm.xlu0 %677, %v673
        %v679 = vpop.permute.xlu0 %678
        %v680 = vlaneseq
        %v681 = vshrl.u32 %v680, 7
        %v682 = vadd.s32 %v681, 8
        %683 = vset.pattern.permute.xlu0 %v682
        %684 = vperm.xlu0 %683, %v673
        %v685 = vpop.permute.xlu0 %684
        %v686 = vlaneseq
        %v687 = vshrl.u32 %v686, 7
        %v688 = vadd.s32 %v687, 16
        %689 = vset.pattern.permute.xlu0 %v688
        %690 = vperm.xlu0 %689, %v673
        %v691 = vpop.permute.xlu0 %690
        %v692 = vlaneseq
        %v693 = vshrl.u32 %v692, 7
        %v694 = vadd.s32 %v693, 24
        %695 = vset.pattern.permute.xlu0 %v694
        %696 = vperm.xlu0 %695, %v673
        %v697 = vpop.permute.xlu0 %696
        %v698 = vperm.slane %v171, 5
        %v699 = vlaneseq
        %v700 = vshrl.u32 %v699, 7
        %702 = vset.pattern.permute.xlu0 %v700
        %703 = vperm.xlu0 %702, %v698
        %v704 = vpop.permute.xlu0 %703
        %v705 = vlaneseq
        %v706 = vshrl.u32 %v705, 7
        %v707 = vadd.s32 %v706, 8
        %708 = vset.pattern.permute.xlu0 %v707
        %709 = vperm.xlu0 %708, %v698
        %v710 = vpop.permute.xlu0 %709
        %v711 = vlaneseq
        %v712 = vshrl.u32 %v711, 7
        %v713 = vadd.s32 %v712, 16
        %714 = vset.pattern.permute.xlu0 %v713
        %715 = vperm.xlu0 %714, %v698
        %v716 = vpop.permute.xlu0 %715
        %v717 = vlaneseq
        %v718 = vshrl.u32 %v717, 7
        %v719 = vadd.s32 %v718, 24
        %720 = vset.pattern.permute.xlu0 %v719
        %721 = vperm.xlu0 %720, %v698
        %v722 = vpop.permute.xlu0 %721
        %v723 = vperm.slane %v171, 6
        %v724 = vlaneseq
        %v725 = vshrl.u32 %v724, 7
        %727 = vset.pattern.permute.xlu0 %v725
        %728 = vperm.xlu0 %727, %v723
        %v729 = vpop.permute.xlu0 %728
        %v730 = vlaneseq
        %v731 = vshrl.u32 %v730, 7
        %v732 = vadd.s32 %v731, 8
        %733 = vset.pattern.permute.xlu0 %v732
        %734 = vperm.xlu0 %733, %v723
        %v735 = vpop.permute.xlu0 %734
        %v736 = vlaneseq
        %v737 = vshrl.u32 %v736, 7
        %v738 = vadd.s32 %v737, 16
        %739 = vset.pattern.permute.xlu0 %v738
        %740 = vperm.xlu0 %739, %v723
        %v741 = vpop.permute.xlu0 %740
        %v742 = vlaneseq
        %v743 = vshrl.u32 %v742, 7
        %v744 = vadd.s32 %v743, 24
        %745 = vset.pattern.permute.xlu0 %v744
        %746 = vperm.xlu0 %745, %v723
        %v747 = vpop.permute.xlu0 %746
        %v748 = vperm.slane %v171, 7
        %v749 = vlaneseq
        %v750 = vshrl.u32 %v749, 7
        %752 = vset.pattern.permute.xlu0 %v750
        %753 = vperm.xlu0 %752, %v748
        %v754 = vpop.permute.xlu0 %753
        %v755 = vlaneseq
        %v756 = vshrl.u32 %v755, 7
        %v757 = vadd.s32 %v756, 8
        %758 = vset.pattern.permute.xlu0 %v757
        %759 = vperm.xlu0 %758, %v748
        %v760 = vpop.permute.xlu0 %759
        %v761 = vlaneseq
        %v762 = vshrl.u32 %v761, 7
        %v763 = vadd.s32 %v762, 16
        %764 = vset.pattern.permute.xlu0 %v763
        %765 = vperm.xlu0 %764, %v748
        %v766 = vpop.permute.xlu0 %765
        %v767 = vlaneseq
        %v768 = vshrl.u32 %v767, 7
        %v769 = vadd.s32 %v768, 24
        %770 = vset.pattern.permute.xlu0 %v769
        %771 = vperm.xlu0 %770, %v748
        %v772 = vpop.permute.xlu0 %771
        %v773 = vperm.slane %v172, 0
        %v774 = vlaneseq
        %v775 = vshrl.u32 %v774, 7
        %777 = vset.pattern.permute.xlu0 %v775
        %778 = vperm.xlu0 %777, %v773
        %v779 = vpop.permute.xlu0 %778
        %v780 = vlaneseq
        %v781 = vshrl.u32 %v780, 7
        %v782 = vadd.s32 %v781, 8
        %783 = vset.pattern.permute.xlu0 %v782
        %784 = vperm.xlu0 %783, %v773
        %v785 = vpop.permute.xlu0 %784
        %v786 = vlaneseq
        %v787 = vshrl.u32 %v786, 7
        %v788 = vadd.s32 %v787, 16
        %789 = vset.pattern.permute.xlu0 %v788
        %790 = vperm.xlu0 %789, %v773
        %v791 = vpop.permute.xlu0 %790
        %v792 = vlaneseq
        %v793 = vshrl.u32 %v792, 7
        %v794 = vadd.s32 %v793, 24
        %795 = vset.pattern.permute.xlu0 %v794
        %796 = vperm.xlu0 %795, %v773
        %v797 = vpop.permute.xlu0 %796
        %v798 = vperm.slane %v172, 1
        %v799 = vlaneseq
        %v800 = vshrl.u32 %v799, 7
        %802 = vset.pattern.permute.xlu0 %v800
        %803 = vperm.xlu0 %802, %v798
        %v804 = vpop.permute.xlu0 %803
        %v805 = vlaneseq
        %v806 = vshrl.u32 %v805, 7
        %v807 = vadd.s32 %v806, 8
        %808 = vset.pattern.permute.xlu0 %v807
        %809 = vperm.xlu0 %808, %v798
        %v810 = vpop.permute.xlu0 %809
        %v811 = vlaneseq
        %v812 = vshrl.u32 %v811, 7
        %v813 = vadd.s32 %v812, 16
        %814 = vset.pattern.permute.xlu0 %v813
        %815 = vperm.xlu0 %814, %v798
        %v816 = vpop.permute.xlu0 %815
        %v817 = vlaneseq
        %v818 = vshrl.u32 %v817, 7
        %v819 = vadd.s32 %v818, 24
        %820 = vset.pattern.permute.xlu0 %v819
        %821 = vperm.xlu0 %820, %v798
        %v822 = vpop.permute.xlu0 %821
        %v823 = vperm.slane %v172, 2
        %v824 = vlaneseq
        %v825 = vshrl.u32 %v824, 7
        %827 = vset.pattern.permute.xlu0 %v825
        %828 = vperm.xlu0 %827, %v823
        %v829 = vpop.permute.xlu0 %828
        %v830 = vlaneseq
        %v831 = vshrl.u32 %v830, 7
        %v832 = vadd.s32 %v831, 8
        %833 = vset.pattern.permute.xlu0 %v832
        %834 = vperm.xlu0 %833, %v823
        %v835 = vpop.permute.xlu0 %834
        %v836 = vlaneseq
        %v837 = vshrl.u32 %v836, 7
        %v838 = vadd.s32 %v837, 16
        %839 = vset.pattern.permute.xlu0 %v838
        %840 = vperm.xlu0 %839, %v823
        %v841 = vpop.permute.xlu0 %840
        %v842 = vlaneseq
        %v843 = vshrl.u32 %v842, 7
        %v844 = vadd.s32 %v843, 24
        %845 = vset.pattern.permute.xlu0 %v844
        %846 = vperm.xlu0 %845, %v823
        %v847 = vpop.permute.xlu0 %846
        %v848 = vperm.slane %v172, 3
        %v849 = vlaneseq
        %v850 = vshrl.u32 %v849, 7
        %852 = vset.pattern.permute.xlu0 %v850
        %853 = vperm.xlu0 %852, %v848
        %v854 = vpop.permute.xlu0 %853
        %v855 = vlaneseq
        %v856 = vshrl.u32 %v855, 7
        %v857 = vadd.s32 %v856, 8
        %858 = vset.pattern.permute.xlu0 %v857
        %859 = vperm.xlu0 %858, %v848
        %v860 = vpop.permute.xlu0 %859
        %v861 = vlaneseq
        %v862 = vshrl.u32 %v861, 7
        %v863 = vadd.s32 %v862, 16
        %864 = vset.pattern.permute.xlu0 %v863
        %865 = vperm.xlu0 %864, %v848
        %v866 = vpop.permute.xlu0 %865
        %v867 = vlaneseq
        %v868 = vshrl.u32 %v867, 7
        %v869 = vadd.s32 %v868, 24
        %870 = vset.pattern.permute.xlu0 %v869
        %871 = vperm.xlu0 %870, %v848
        %v872 = vpop.permute.xlu0 %871
        %v873 = vperm.slane %v172, 4
        %v874 = vlaneseq
        %v875 = vshrl.u32 %v874, 7
        %877 = vset.pattern.permute.xlu0 %v875
        %878 = vperm.xlu0 %877, %v873
        %v879 = vpop.permute.xlu0 %878
        %v880 = vlaneseq
        %v881 = vshrl.u32 %v880, 7
        %v882 = vadd.s32 %v881, 8
        %883 = vset.pattern.permute.xlu0 %v882
        %884 = vperm.xlu0 %883, %v873
        %v885 = vpop.permute.xlu0 %884
        %v886 = vlaneseq
        %v887 = vshrl.u32 %v886, 7
        %v888 = vadd.s32 %v887, 16
        %889 = vset.pattern.permute.xlu0 %v888
        %890 = vperm.xlu0 %889, %v873
        %v891 = vpop.permute.xlu0 %890
        %v892 = vlaneseq
        %v893 = vshrl.u32 %v892, 7
        %v894 = vadd.s32 %v893, 24
        %895 = vset.pattern.permute.xlu0 %v894
        %896 = vperm.xlu0 %895, %v873
        %v897 = vpop.permute.xlu0 %896
        %v898 = vperm.slane %v172, 5
        %v899 = vlaneseq
        %v900 = vshrl.u32 %v899, 7
        %902 = vset.pattern.permute.xlu0 %v900
        %903 = vperm.xlu0 %902, %v898
        %v904 = vpop.permute.xlu0 %903
        %v905 = vlaneseq
        %v906 = vshrl.u32 %v905, 7
        %v907 = vadd.s32 %v906, 8
        %908 = vset.pattern.permute.xlu0 %v907
        %909 = vperm.xlu0 %908, %v898
        %v910 = vpop.permute.xlu0 %909
        %v911 = vlaneseq
        %v912 = vshrl.u32 %v911, 7
        %v913 = vadd.s32 %v912, 16
        %914 = vset.pattern.permute.xlu0 %v913
        %915 = vperm.xlu0 %914, %v898
        %v916 = vpop.permute.xlu0 %915
        %v917 = vlaneseq
        %v918 = vshrl.u32 %v917, 7
        %v919 = vadd.s32 %v918, 24
        %920 = vset.pattern.permute.xlu0 %v919
        %921 = vperm.xlu0 %920, %v898
        %v922 = vpop.permute.xlu0 %921
        %v923 = vperm.slane %v172, 6
        %v924 = vlaneseq
        %v925 = vshrl.u32 %v924, 7
        %927 = vset.pattern.permute.xlu0 %v925
        %928 = vperm.xlu0 %927, %v923
        %v929 = vpop.permute.xlu0 %928
        %v930 = vlaneseq
        %v931 = vshrl.u32 %v930, 7
        %v932 = vadd.s32 %v931, 8
        %933 = vset.pattern.permute.xlu0 %v932
        %934 = vperm.xlu0 %933, %v923
        %v935 = vpop.permute.xlu0 %934
        %v936 = vlaneseq
        %v937 = vshrl.u32 %v936, 7
        %v938 = vadd.s32 %v937, 16
        %939 = vset.pattern.permute.xlu0 %v938
        %940 = vperm.xlu0 %939, %v923
        %v941 = vpop.permute.xlu0 %940
        %v942 = vlaneseq
        %v943 = vshrl.u32 %v942, 7
        %v944 = vadd.s32 %v943, 24
        %945 = vset.pattern.permute.xlu0 %v944
        %946 = vperm.xlu0 %945, %v923
        %v947 = vpop.permute.xlu0 %946
        %v948 = vperm.slane %v172, 7
        %v949 = vlaneseq
        %v950 = vshrl.u32 %v949, 7
        %952 = vset.pattern.permute.xlu0 %v950
        %953 = vperm.xlu0 %952, %v948
        %v954 = vpop.permute.xlu0 %953
        %v955 = vlaneseq
        %v956 = vshrl.u32 %v955, 7
        %v957 = vadd.s32 %v956, 8
        %958 = vset.pattern.permute.xlu0 %v957
        %959 = vperm.xlu0 %958, %v948
        %v960 = vpop.permute.xlu0 %959
        %v961 = vlaneseq
        %v962 = vshrl.u32 %v961, 7
        %v963 = vadd.s32 %v962, 16
        %964 = vset.pattern.permute.xlu0 %v963
        %965 = vperm.xlu0 %964, %v948
        %v966 = vpop.permute.xlu0 %965
        %v967 = vlaneseq
        %v968 = vshrl.u32 %v967, 7
        %v969 = vadd.s32 %v968, 24
        %970 = vset.pattern.permute.xlu0 %v969
        %971 = vperm.xlu0 %970, %v948
        %v972 = vpop.permute.xlu0 %971
        %v973 = vrot.slane %v229, 4
        %vm974 = vcmask 1047556
        %v975 = vsel %vm974, %v973, %v179
        %v976 = vrot.slane %v179, 4
        %v977 = vsel %vm974, %v229, %v976
        %v979 = vunpack.c.l.s4 1983009808
        %v980 = vunpack.c.0.s8 %v979
        %v981 = vperm.slane %v975, %v980
        %v983 = vunpack.c.l.s4 1983009808
        %v984 = vunpack.c.0.s8 %v983
        %v985 = vperm.slane %v977, %v984
        %v986 = vrot.slane %v254, 4
        %v987 = vsel %vm974, %v986, %v204
        %v988 = vrot.slane %v204, 4
        %v989 = vsel %vm974, %v254, %v988
        %v991 = vunpack.c.l.s4 1983009808
        %v992 = vunpack.c.0.s8 %v991
        %v993 = vperm.slane %v987, %v992
        %v995 = vunpack.c.l.s4 1983009808
        %v996 = vunpack.c.0.s8 %v995
        %v997 = vperm.slane %v989, %v996
        %v998 = vrot.slane %v329, 4
        %v999 = vsel %vm974, %v998, %v279
        %v1000 = vrot.slane %v279, 4
        %v1001 = vsel %vm974, %v329, %v1000
        %v1003 = vunpack.c.l.s4 1983009808
        %v1004 = vunpack.c.0.s8 %v1003
        %v1005 = vperm.slane %v999, %v1004
        %v1007 = vunpack.c.l.s4 1983009808
        %v1008 = vunpack.c.0.s8 %v1007
        %v1009 = vperm.slane %v1001, %v1008
        %v1010 = vrot.slane %v354, 4
        %v1011 = vsel %vm974, %v1010, %v304
        %v1012 = vrot.slane %v304, 4
        %v1013 = vsel %vm974, %v354, %v1012
        %v1015 = vunpack.c.l.s4 1983009808
        %v1016 = vunpack.c.0.s8 %v1015
        %v1017 = vperm.slane %v1011, %v1016
        %v1019 = vunpack.c.l.s4 1983009808
        %v1020 = vunpack.c.0.s8 %v1019
        %v1021 = vperm.slane %v1013, %v1020
        %v1022 = vrot.slane %v993, 4
        %v1023 = vsel %vm974, %v1022, %v981
        %v1024 = vrot.slane %v981, 4
        %v1025 = vsel %vm974, %v993, %v1024
        %v1027 = vunpack.c.l.s4 1934713408
        %v1028 = vunpack.c.0.s8 %v1027
        %v1029 = vperm.slane %v1023, %v1028
        %v1031 = vunpack.c.l.s4 1934713408
        %v1032 = vunpack.c.0.s8 %v1031
        %v1033 = vperm.slane %v1025, %v1032
        %v1034 = vrot.slane %v997, 4
        %v1035 = vsel %vm974, %v1034, %v985
        %v1036 = vrot.slane %v985, 4
        %v1037 = vsel %vm974, %v997, %v1036
        %v1039 = vunpack.c.l.s4 1934713408
        %v1040 = vunpack.c.0.s8 %v1039
        %v1041 = vperm.slane %v1035, %v1040
        %v1043 = vunpack.c.l.s4 1934713408
        %v1044 = vunpack.c.0.s8 %v1043
        %v1045 = vperm.slane %v1037, %v1044
        %v1046 = vrot.slane %v1017, 4
        %v1047 = vsel %vm974, %v1046, %v1005
        %v1048 = vrot.slane %v1005, 4
        %v1049 = vsel %vm974, %v1017, %v1048
        %v1051 = vunpack.c.l.s4 1934713408
        %v1052 = vunpack.c.0.s8 %v1051
        %v1053 = vperm.slane %v1047, %v1052
        %v1055 = vunpack.c.l.s4 1934713408
        %v1056 = vunpack.c.0.s8 %v1055
        %v1057 = vperm.slane %v1049, %v1056
        %v1058 = vrot.slane %v1021, 4
        %v1059 = vsel %vm974, %v1058, %v1009
        %v1060 = vrot.slane %v1009, 4
        %v1061 = vsel %vm974, %v1021, %v1060
        %v1063 = vunpack.c.l.s4 1934713408
        %v1064 = vunpack.c.0.s8 %v1063
        %v1065 = vperm.slane %v1059, %v1064
        %v1067 = vunpack.c.l.s4 1934713408
        %v1068 = vunpack.c.0.s8 %v1067
        %v1069 = vperm.slane %v1061, %v1068
        %v1070 = vrot.slane %v1053, 4
        %v1071 = vsel %vm974, %v1070, %v1029
        %v1072 = vrot.slane %v1029, 4
        %v1073 = vsel %vm974, %v1053, %v1072
        %v1074 = vrot.slane %v1057, 4
        %v1075 = vsel %vm974, %v1074, %v1033
        %v1076 = vrot.slane %v1033, 4
        %v1077 = vsel %vm974, %v1057, %v1076
        %v1078 = vrot.slane %v1065, 4
        %v1079 = vsel %vm974, %v1078, %v1041
        %v1080 = vrot.slane %v1041, 4
        %v1081 = vsel %vm974, %v1065, %v1080
        %v1082 = vrot.slane %v1069, 4
        %v1083 = vsel %vm974, %v1082, %v1045
        %v1084 = vrot.slane %v1045, 4
        %v1085 = vsel %vm974, %v1069, %v1084
        %v1086 = vrot.slane %v235, 4
        %v1087 = vsel %vm974, %v1086, %v185
        %v1088 = vrot.slane %v185, 4
        %v1089 = vsel %vm974, %v235, %v1088
        %v1091 = vunpack.c.l.s4 1983009808
        %v1092 = vunpack.c.0.s8 %v1091
        %v1093 = vperm.slane %v1087, %v1092
        %v1095 = vunpack.c.l.s4 1983009808
        %v1096 = vunpack.c.0.s8 %v1095
        %v1097 = vperm.slane %v1089, %v1096
        %v1098 = vrot.slane %v260, 4
        %v1099 = vsel %vm974, %v1098, %v210
        %v1100 = vrot.slane %v210, 4
        %v1101 = vsel %vm974, %v260, %v1100
        %v1103 = vunpack.c.l.s4 1983009808
        %v1104 = vunpack.c.0.s8 %v1103
        %v1105 = vperm.slane %v1099, %v1104
        %v1107 = vunpack.c.l.s4 1983009808
        %v1108 = vunpack.c.0.s8 %v1107
        %v1109 = vperm.slane %v1101, %v1108
        %v1110 = vrot.slane %v335, 4
        %v1111 = vsel %vm974, %v1110, %v285
        %v1112 = vrot.slane %v285, 4
        %v1113 = vsel %vm974, %v335, %v1112
        %v1115 = vunpack.c.l.s4 1983009808
        %v1116 = vunpack.c.0.s8 %v1115
        %v1117 = vperm.slane %v1111, %v1116
        %v1119 = vunpack.c.l.s4 1983009808
        %v1120 = vunpack.c.0.s8 %v1119
        %v1121 = vperm.slane %v1113, %v1120
        %v1122 = vrot.slane %v360, 4
        %v1123 = vsel %vm974, %v1122, %v310
        %v1124 = vrot.slane %v310, 4
        %v1125 = vsel %vm974, %v360, %v1124
        %v1127 = vunpack.c.l.s4 1983009808
        %v1128 = vunpack.c.0.s8 %v1127
        %v1129 = vperm.slane %v1123, %v1128
        %v1131 = vunpack.c.l.s4 1983009808
        %v1132 = vunpack.c.0.s8 %v1131
        %v1133 = vperm.slane %v1125, %v1132
        %v1134 = vrot.slane %v1105, 4
        %v1135 = vsel %vm974, %v1134, %v1093
        %v1136 = vrot.slane %v1093, 4
        %v1137 = vsel %vm974, %v1105, %v1136
        %v1139 = vunpack.c.l.s4 1934713408
        %v1140 = vunpack.c.0.s8 %v1139
        %v1141 = vperm.slane %v1135, %v1140
        %v1143 = vunpack.c.l.s4 1934713408
        %v1144 = vunpack.c.0.s8 %v1143
        %v1145 = vperm.slane %v1137, %v1144
        %v1146 = vrot.slane %v1109, 4
        %v1147 = vsel %vm974, %v1146, %v1097
        %v1148 = vrot.slane %v1097, 4
        %v1149 = vsel %vm974, %v1109, %v1148
        %v1151 = vunpack.c.l.s4 1934713408
        %v1152 = vunpack.c.0.s8 %v1151
        %v1153 = vperm.slane %v1147, %v1152
        %v1155 = vunpack.c.l.s4 1934713408
        %v1156 = vunpack.c.0.s8 %v1155
        %v1157 = vperm.slane %v1149, %v1156
        %v1158 = vrot.slane %v1129, 4
        %v1159 = vsel %vm974, %v1158, %v1117
        %v1160 = vrot.slane %v1117, 4
        %v1161 = vsel %vm974, %v1129, %v1160
        %v1163 = vunpack.c.l.s4 1934713408
        %v1164 = vunpack.c.0.s8 %v1163
        %v1165 = vperm.slane %v1159, %v1164
        %v1167 = vunpack.c.l.s4 1934713408
        %v1168 = vunpack.c.0.s8 %v1167
        %v1169 = vperm.slane %v1161, %v1168
        %v1170 = vrot.slane %v1133, 4
        %v1171 = vsel %vm974, %v1170, %v1121
        %v1172 = vrot.slane %v1121, 4
        %v1173 = vsel %vm974, %v1133, %v1172
        %v1175 = vunpack.c.l.s4 1934713408
        %v1176 = vunpack.c.0.s8 %v1175
        %v1177 = vperm.slane %v1171, %v1176
        %v1179 = vunpack.c.l.s4 1934713408
        %v1180 = vunpack.c.0.s8 %v1179
        %v1181 = vperm.slane %v1173, %v1180
        %v1182 = vrot.slane %v1165, 4
        %v1183 = vsel %vm974, %v1182, %v1141
        %v1184 = vrot.slane %v1141, 4
        %v1185 = vsel %vm974, %v1165, %v1184
        %v1186 = vrot.slane %v1169, 4
        %v1187 = vsel %vm974, %v1186, %v1145
        %v1188 = vrot.slane %v1145, 4
        %v1189 = vsel %vm974, %v1169, %v1188
        %v1190 = vrot.slane %v1177, 4
        %v1191 = vsel %vm974, %v1190, %v1153
        %v1192 = vrot.slane %v1153, 4
        %v1193 = vsel %vm974, %v1177, %v1192
        %v1194 = vrot.slane %v1181, 4
        %v1195 = vsel %vm974, %v1194, %v1157
        %v1196 = vrot.slane %v1157, 4
        %v1197 = vsel %vm974, %v1181, %v1196
        %v1198 = vrot.slane %v241, 4
        %v1199 = vsel %vm974, %v1198, %v191
        %v1200 = vrot.slane %v191, 4
        %v1201 = vsel %vm974, %v241, %v1200
        %v1203 = vunpack.c.l.s4 1983009808
        %v1204 = vunpack.c.0.s8 %v1203
        %v1205 = vperm.slane %v1199, %v1204
        %v1207 = vunpack.c.l.s4 1983009808
        %v1208 = vunpack.c.0.s8 %v1207
        %v1209 = vperm.slane %v1201, %v1208
        %v1210 = vrot.slane %v266, 4
        %v1211 = vsel %vm974, %v1210, %v216
        %v1212 = vrot.slane %v216, 4
        %v1213 = vsel %vm974, %v266, %v1212
        %v1215 = vunpack.c.l.s4 1983009808
        %v1216 = vunpack.c.0.s8 %v1215
        %v1217 = vperm.slane %v1211, %v1216
        %v1219 = vunpack.c.l.s4 1983009808
        %v1220 = vunpack.c.0.s8 %v1219
        %v1221 = vperm.slane %v1213, %v1220
        %v1222 = vrot.slane %v341, 4
        %v1223 = vsel %vm974, %v1222, %v291
        %v1224 = vrot.slane %v291, 4
        %v1225 = vsel %vm974, %v341, %v1224
        %v1227 = vunpack.c.l.s4 1983009808
        %v1228 = vunpack.c.0.s8 %v1227
        %v1229 = vperm.slane %v1223, %v1228
        %v1231 = vunpack.c.l.s4 1983009808
        %v1232 = vunpack.c.0.s8 %v1231
        %v1233 = vperm.slane %v1225, %v1232
        %v1234 = vrot.slane %v366, 4
        %v1235 = vsel %vm974, %v1234, %v316
        %v1236 = vrot.slane %v316, 4
        %v1237 = vsel %vm974, %v366, %v1236
        %v1239 = vunpack.c.l.s4 1983009808
        %v1240 = vunpack.c.0.s8 %v1239
        %v1241 = vperm.slane %v1235, %v1240
        %v1243 = vunpack.c.l.s4 1983009808
        %v1244 = vunpack.c.0.s8 %v1243
        %v1245 = vperm.slane %v1237, %v1244
        %v1246 = vrot.slane %v1217, 4
        %v1247 = vsel %vm974, %v1246, %v1205
        %v1248 = vrot.slane %v1205, 4
        %v1249 = vsel %vm974, %v1217, %v1248
        %v1251 = vunpack.c.l.s4 1934713408
        %v1252 = vunpack.c.0.s8 %v1251
        %v1253 = vperm.slane %v1247, %v1252
        %v1255 = vunpack.c.l.s4 1934713408
        %v1256 = vunpack.c.0.s8 %v1255
        %v1257 = vperm.slane %v1249, %v1256
        %v1258 = vrot.slane %v1221, 4
        %v1259 = vsel %vm974, %v1258, %v1209
        %v1260 = vrot.slane %v1209, 4
        %v1261 = vsel %vm974, %v1221, %v1260
        %v1263 = vunpack.c.l.s4 1934713408
        %v1264 = vunpack.c.0.s8 %v1263
        %v1265 = vperm.slane %v1259, %v1264
        %v1267 = vunpack.c.l.s4 1934713408
        %v1268 = vunpack.c.0.s8 %v1267
        %v1269 = vperm.slane %v1261, %v1268
        %v1270 = vrot.slane %v1241, 4
        %v1271 = vsel %vm974, %v1270, %v1229
        %v1272 = vrot.slane %v1229, 4
        %v1273 = vsel %vm974, %v1241, %v1272
        %v1275 = vunpack.c.l.s4 1934713408
        %v1276 = vunpack.c.0.s8 %v1275
        %v1277 = vperm.slane %v1271, %v1276
        %v1279 = vunpack.c.l.s4 1934713408
        %v1280 = vunpack.c.0.s8 %v1279
        %v1281 = vperm.slane %v1273, %v1280
        %v1282 = vrot.slane %v1245, 4
        %v1283 = vsel %vm974, %v1282, %v1233
        %v1284 = vrot.slane %v1233, 4
        %v1285 = vsel %vm974, %v1245, %v1284
        %v1287 = vunpack.c.l.s4 1934713408
        %v1288 = vunpack.c.0.s8 %v1287
        %v1289 = vperm.slane %v1283, %v1288
        %v1291 = vunpack.c.l.s4 1934713408
        %v1292 = vunpack.c.0.s8 %v1291
        %v1293 = vperm.slane %v1285, %v1292
        %v1294 = vrot.slane %v1277, 4
        %v1295 = vsel %vm974, %v1294, %v1253
        %v1296 = vrot.slane %v1253, 4
        %v1297 = vsel %vm974, %v1277, %v1296
        %v1298 = vrot.slane %v1281, 4
        %v1299 = vsel %vm974, %v1298, %v1257
        %v1300 = vrot.slane %v1257, 4
        %v1301 = vsel %vm974, %v1281, %v1300
        %v1302 = vrot.slane %v1289, 4
        %v1303 = vsel %vm974, %v1302, %v1265
        %v1304 = vrot.slane %v1265, 4
        %v1305 = vsel %vm974, %v1289, %v1304
        %v1306 = vrot.slane %v1293, 4
        %v1307 = vsel %vm974, %v1306, %v1269
        %v1308 = vrot.slane %v1269, 4
        %v1309 = vsel %vm974, %v1293, %v1308
        %v1310 = vrot.slane %v247, 4
        %v1311 = vsel %vm974, %v1310, %v197
        %v1312 = vrot.slane %v197, 4
        %v1313 = vsel %vm974, %v247, %v1312
        %v1315 = vunpack.c.l.s4 1983009808
        %v1316 = vunpack.c.0.s8 %v1315
        %v1317 = vperm.slane %v1311, %v1316
        %v1319 = vunpack.c.l.s4 1983009808
        %v1320 = vunpack.c.0.s8 %v1319
        %v1321 = vperm.slane %v1313, %v1320
        %v1322 = vrot.slane %v272, 4
        %v1323 = vsel %vm974, %v1322, %v222
        %v1324 = vrot.slane %v222, 4
        %v1325 = vsel %vm974, %v272, %v1324
        %v1327 = vunpack.c.l.s4 1983009808
        %v1328 = vunpack.c.0.s8 %v1327
        %v1329 = vperm.slane %v1323, %v1328
        %v1331 = vunpack.c.l.s4 1983009808
        %v1332 = vunpack.c.0.s8 %v1331
        %v1333 = vperm.slane %v1325, %v1332
        %v1334 = vrot.slane %v347, 4
        %v1335 = vsel %vm974, %v1334, %v297
        %v1336 = vrot.slane %v297, 4
        %v1337 = vsel %vm974, %v347, %v1336
        %v1339 = vunpack.c.l.s4 1983009808
        %v1340 = vunpack.c.0.s8 %v1339
        %v1341 = vperm.slane %v1335, %v1340
        %v1343 = vunpack.c.l.s4 1983009808
        %v1344 = vunpack.c.0.s8 %v1343
        %v1345 = vperm.slane %v1337, %v1344
        %v1346 = vrot.slane %v372, 4
        %v1347 = vsel %vm974, %v1346, %v322
        %v1348 = vrot.slane %v322, 4
        %v1349 = vsel %vm974, %v372, %v1348
        %v1351 = vunpack.c.l.s4 1983009808
        %v1352 = vunpack.c.0.s8 %v1351
        %v1353 = vperm.slane %v1347, %v1352
        %v1355 = vunpack.c.l.s4 1983009808
        %v1356 = vunpack.c.0.s8 %v1355
        %v1357 = vperm.slane %v1349, %v1356
        %v1358 = vrot.slane %v1329, 4
        %v1359 = vsel %vm974, %v1358, %v1317
        %v1360 = vrot.slane %v1317, 4
        %v1361 = vsel %vm974, %v1329, %v1360
        %v1363 = vunpack.c.l.s4 1934713408
        %v1364 = vunpack.c.0.s8 %v1363
        %v1365 = vperm.slane %v1359, %v1364
        %v1367 = vunpack.c.l.s4 1934713408
        %v1368 = vunpack.c.0.s8 %v1367
        %v1369 = vperm.slane %v1361, %v1368
        %v1370 = vrot.slane %v1333, 4
        %v1371 = vsel %vm974, %v1370, %v1321
        %v1372 = vrot.slane %v1321, 4
        %v1373 = vsel %vm974, %v1333, %v1372
        %v1375 = vunpack.c.l.s4 1934713408
        %v1376 = vunpack.c.0.s8 %v1375
        %v1377 = vperm.slane %v1371, %v1376
        %v1379 = vunpack.c.l.s4 1934713408
        %v1380 = vunpack.c.0.s8 %v1379
        %v1381 = vperm.slane %v1373, %v1380
        %v1382 = vrot.slane %v1353, 4
        %v1383 = vsel %vm974, %v1382, %v1341
        %v1384 = vrot.slane %v1341, 4
        %v1385 = vsel %vm974, %v1353, %v1384
        %v1387 = vunpack.c.l.s4 1934713408
        %v1388 = vunpack.c.0.s8 %v1387
        %v1389 = vperm.slane %v1383, %v1388
        %v1391 = vunpack.c.l.s4 1934713408
        %v1392 = vunpack.c.0.s8 %v1391
        %v1393 = vperm.slane %v1385, %v1392
        %v1394 = vrot.slane %v1357, 4
        %v1395 = vsel %vm974, %v1394, %v1345
        %v1396 = vrot.slane %v1345, 4
        %v1397 = vsel %vm974, %v1357, %v1396
        %v1399 = vunpack.c.l.s4 1934713408
        %v1400 = vunpack.c.0.s8 %v1399
        %v1401 = vperm.slane %v1395, %v1400
        %v1403 = vunpack.c.l.s4 1934713408
        %v1404 = vunpack.c.0.s8 %v1403
        %v1405 = vperm.slane %v1397, %v1404
        %v1406 = vrot.slane %v1389, 4
        %v1407 = vsel %vm974, %v1406, %v1365
        %v1408 = vrot.slane %v1365, 4
        %v1409 = vsel %vm974, %v1389, %v1408
        %v1410 = vrot.slane %v1393, 4
        %v1411 = vsel %vm974, %v1410, %v1369
        %v1412 = vrot.slane %v1369, 4
        %v1413 = vsel %vm974, %v1393, %v1412
        %v1414 = vrot.slane %v1401, 4
        %v1415 = vsel %vm974, %v1414, %v1377
        %v1416 = vrot.slane %v1377, 4
        %v1417 = vsel %vm974, %v1401, %v1416
        %v1418 = vrot.slane %v1405, 4
        %v1419 = vsel %vm974, %v1418, %v1381
        %v1420 = vrot.slane %v1381, 4
        %v1421 = vsel %vm974, %v1405, %v1420
        %v1422 = vrot.slane %v429, 4
        %v1423 = vsel %vm974, %v1422, %v379
        %v1424 = vrot.slane %v379, 4
        %v1425 = vsel %vm974, %v429, %v1424
        %v1427 = vunpack.c.l.s4 1983009808
        %v1428 = vunpack.c.0.s8 %v1427
        %v1429 = vperm.slane %v1423, %v1428
        %v1431 = vunpack.c.l.s4 1983009808
        %v1432 = vunpack.c.0.s8 %v1431
        %v1433 = vperm.slane %v1425, %v1432
        %v1434 = vrot.slane %v454, 4
        %v1435 = vsel %vm974, %v1434, %v404
        %v1436 = vrot.slane %v404, 4
        %v1437 = vsel %vm974, %v454, %v1436
        %v1439 = vunpack.c.l.s4 1983009808
        %v1440 = vunpack.c.0.s8 %v1439
        %v1441 = vperm.slane %v1435, %v1440
        %v1443 = vunpack.c.l.s4 1983009808
        %v1444 = vunpack.c.0.s8 %v1443
        %v1445 = vperm.slane %v1437, %v1444
        %v1446 = vrot.slane %v529, 4
        %v1447 = vsel %vm974, %v1446, %v479
        %v1448 = vrot.slane %v479, 4
        %v1449 = vsel %vm974, %v529, %v1448
        %v1451 = vunpack.c.l.s4 1983009808
        %v1452 = vunpack.c.0.s8 %v1451
        %v1453 = vperm.slane %v1447, %v1452
        %v1455 = vunpack.c.l.s4 1983009808
        %v1456 = vunpack.c.0.s8 %v1455
        %v1457 = vperm.slane %v1449, %v1456
        %v1458 = vrot.slane %v554, 4
        %v1459 = vsel %vm974, %v1458, %v504
        %v1460 = vrot.slane %v504, 4
        %v1461 = vsel %vm974, %v554, %v1460
        %v1463 = vunpack.c.l.s4 1983009808
        %v1464 = vunpack.c.0.s8 %v1463
        %v1465 = vperm.slane %v1459, %v1464
        %v1467 = vunpack.c.l.s4 1983009808
        %v1468 = vunpack.c.0.s8 %v1467
        %v1469 = vperm.slane %v1461, %v1468
        %v1470 = vrot.slane %v1441, 4
        %v1471 = vsel %vm974, %v1470, %v1429
        %v1472 = vrot.slane %v1429, 4
        %v1473 = vsel %vm974, %v1441, %v1472
        %v1475 = vunpack.c.l.s4 1934713408
        %v1476 = vunpack.c.0.s8 %v1475
        %v1477 = vperm.slane %v1471, %v1476
        %v1479 = vunpack.c.l.s4 1934713408
        %v1480 = vunpack.c.0.s8 %v1479
        %v1481 = vperm.slane %v1473, %v1480
        %v1482 = vrot.slane %v1445, 4
        %v1483 = vsel %vm974, %v1482, %v1433
        %v1484 = vrot.slane %v1433, 4
        %v1485 = vsel %vm974, %v1445, %v1484
        %v1487 = vunpack.c.l.s4 1934713408
        %v1488 = vunpack.c.0.s8 %v1487
        %v1489 = vperm.slane %v1483, %v1488
        %v1491 = vunpack.c.l.s4 1934713408
        %v1492 = vunpack.c.0.s8 %v1491
        %v1493 = vperm.slane %v1485, %v1492
        %v1494 = vrot.slane %v1465, 4
        %v1495 = vsel %vm974, %v1494, %v1453
        %v1496 = vrot.slane %v1453, 4
        %v1497 = vsel %vm974, %v1465, %v1496
        %v1499 = vunpack.c.l.s4 1934713408
        %v1500 = vunpack.c.0.s8 %v1499
        %v1501 = vperm.slane %v1495, %v1500
        %v1503 = vunpack.c.l.s4 1934713408
        %v1504 = vunpack.c.0.s8 %v1503
        %v1505 = vperm.slane %v1497, %v1504
        %v1506 = vrot.slane %v1469, 4
        %v1507 = vsel %vm974, %v1506, %v1457
        %v1508 = vrot.slane %v1457, 4
        %v1509 = vsel %vm974, %v1469, %v1508
        %v1511 = vunpack.c.l.s4 1934713408
        %v1512 = vunpack.c.0.s8 %v1511
        %v1513 = vperm.slane %v1507, %v1512
        %v1515 = vunpack.c.l.s4 1934713408
        %v1516 = vunpack.c.0.s8 %v1515
        %v1517 = vperm.slane %v1509, %v1516
        %v1518 = vrot.slane %v1501, 4
        %v1519 = vsel %vm974, %v1518, %v1477
        %v1520 = vrot.slane %v1477, 4
        %v1521 = vsel %vm974, %v1501, %v1520
        %v1522 = vrot.slane %v1505, 4
        %v1523 = vsel %vm974, %v1522, %v1481
        %v1524 = vrot.slane %v1481, 4
        %v1525 = vsel %vm974, %v1505, %v1524
        %v1526 = vrot.slane %v1513, 4
        %v1527 = vsel %vm974, %v1526, %v1489
        %v1528 = vrot.slane %v1489, 4
        %v1529 = vsel %vm974, %v1513, %v1528
        %v1530 = vrot.slane %v1517, 4
        %v1531 = vsel %vm974, %v1530, %v1493
        %v1532 = vrot.slane %v1493, 4
        %v1533 = vsel %vm974, %v1517, %v1532
        %v1534 = vrot.slane %v435, 4
        %v1535 = vsel %vm974, %v1534, %v385
        %v1536 = vrot.slane %v385, 4
        %v1537 = vsel %vm974, %v435, %v1536
        %v1539 = vunpack.c.l.s4 1983009808
        %v1540 = vunpack.c.0.s8 %v1539
        %v1541 = vperm.slane %v1535, %v1540
        %v1543 = vunpack.c.l.s4 1983009808
        %v1544 = vunpack.c.0.s8 %v1543
        %v1545 = vperm.slane %v1537, %v1544
        %v1546 = vrot.slane %v460, 4
        %v1547 = vsel %vm974, %v1546, %v410
        %v1548 = vrot.slane %v410, 4
        %v1549 = vsel %vm974, %v460, %v1548
        %v1551 = vunpack.c.l.s4 1983009808
        %v1552 = vunpack.c.0.s8 %v1551
        %v1553 = vperm.slane %v1547, %v1552
        %v1555 = vunpack.c.l.s4 1983009808
        %v1556 = vunpack.c.0.s8 %v1555
        %v1557 = vperm.slane %v1549, %v1556
        %v1558 = vrot.slane %v535, 4
        %v1559 = vsel %vm974, %v1558, %v485
        %v1560 = vrot.slane %v485, 4
        %v1561 = vsel %vm974, %v535, %v1560
        %v1563 = vunpack.c.l.s4 1983009808
        %v1564 = vunpack.c.0.s8 %v1563
        %v1565 = vperm.slane %v1559, %v1564
        %v1567 = vunpack.c.l.s4 1983009808
        %v1568 = vunpack.c.0.s8 %v1567
        %v1569 = vperm.slane %v1561, %v1568
        %v1570 = vrot.slane %v560, 4
        %v1571 = vsel %vm974, %v1570, %v510
        %v1572 = vrot.slane %v510, 4
        %v1573 = vsel %vm974, %v560, %v1572
        %v1575 = vunpack.c.l.s4 1983009808
        %v1576 = vunpack.c.0.s8 %v1575
        %v1577 = vperm.slane %v1571, %v1576
        %v1579 = vunpack.c.l.s4 1983009808
        %v1580 = vunpack.c.0.s8 %v1579
        %v1581 = vperm.slane %v1573, %v1580
        %v1582 = vrot.slane %v1553, 4
        %v1583 = vsel %vm974, %v1582, %v1541
        %v1584 = vrot.slane %v1541, 4
        %v1585 = vsel %vm974, %v1553, %v1584
        %v1587 = vunpack.c.l.s4 1934713408
        %v1588 = vunpack.c.0.s8 %v1587
        %v1589 = vperm.slane %v1583, %v1588
        %v1591 = vunpack.c.l.s4 1934713408
        %v1592 = vunpack.c.0.s8 %v1591
        %v1593 = vperm.slane %v1585, %v1592
        %v1594 = vrot.slane %v1557, 4
        %v1595 = vsel %vm974, %v1594, %v1545
        %v1596 = vrot.slane %v1545, 4
        %v1597 = vsel %vm974, %v1557, %v1596
        %v1599 = vunpack.c.l.s4 1934713408
        %v1600 = vunpack.c.0.s8 %v1599
        %v1601 = vperm.slane %v1595, %v1600
        %v1603 = vunpack.c.l.s4 1934713408
        %v1604 = vunpack.c.0.s8 %v1603
        %v1605 = vperm.slane %v1597, %v1604
        %v1606 = vrot.slane %v1577, 4
        %v1607 = vsel %vm974, %v1606, %v1565
        %v1608 = vrot.slane %v1565, 4
        %v1609 = vsel %vm974, %v1577, %v1608
        %v1611 = vunpack.c.l.s4 1934713408
        %v1612 = vunpack.c.0.s8 %v1611
        %v1613 = vperm.slane %v1607, %v1612
        %v1615 = vunpack.c.l.s4 1934713408
        %v1616 = vunpack.c.0.s8 %v1615
        %v1617 = vperm.slane %v1609, %v1616
        %v1618 = vrot.slane %v1581, 4
        %v1619 = vsel %vm974, %v1618, %v1569
        %v1620 = vrot.slane %v1569, 4
        %v1621 = vsel %vm974, %v1581, %v1620
        %v1623 = vunpack.c.l.s4 1934713408
        %v1624 = vunpack.c.0.s8 %v1623
        %v1625 = vperm.slane %v1619, %v1624
        %v1627 = vunpack.c.l.s4 1934713408
        %v1628 = vunpack.c.0.s8 %v1627
        %v1629 = vperm.slane %v1621, %v1628
        %v1630 = vrot.slane %v1613, 4
        %v1631 = vsel %vm974, %v1630, %v1589
        %v1632 = vrot.slane %v1589, 4
        %v1633 = vsel %vm974, %v1613, %v1632
        %v1634 = vrot.slane %v1617, 4
        %v1635 = vsel %vm974, %v1634, %v1593
        %v1636 = vrot.slane %v1593, 4
        %v1637 = vsel %vm974, %v1617, %v1636
        %v1638 = vrot.slane %v1625, 4
        %v1639 = vsel %vm974, %v1638, %v1601
        %v1640 = vrot.slane %v1601, 4
        %v1641 = vsel %vm974, %v1625, %v1640
        %v1642 = vrot.slane %v1629, 4
        %v1643 = vsel %vm974, %v1642, %v1605
        %v1644 = vrot.slane %v1605, 4
        %v1645 = vsel %vm974, %v1629, %v1644
        %v1646 = vrot.slane %v441, 4
        %v1647 = vsel %vm974, %v1646, %v391
        %v1648 = vrot.slane %v391, 4
        %v1649 = vsel %vm974, %v441, %v1648
        %v1651 = vunpack.c.l.s4 1983009808
        %v1652 = vunpack.c.0.s8 %v1651
        %v1653 = vperm.slane %v1647, %v1652
        %v1655 = vunpack.c.l.s4 1983009808
        %v1656 = vunpack.c.0.s8 %v1655
        %v1657 = vperm.slane %v1649, %v1656
        %v1658 = vrot.slane %v466, 4
        %v1659 = vsel %vm974, %v1658, %v416
        %v1660 = vrot.slane %v416, 4
        %v1661 = vsel %vm974, %v466, %v1660
        %v1663 = vunpack.c.l.s4 1983009808
        %v1664 = vunpack.c.0.s8 %v1663
        %v1665 = vperm.slane %v1659, %v1664
        %v1667 = vunpack.c.l.s4 1983009808
        %v1668 = vunpack.c.0.s8 %v1667
        %v1669 = vperm.slane %v1661, %v1668
        %v1670 = vrot.slane %v541, 4
        %v1671 = vsel %vm974, %v1670, %v491
        %v1672 = vrot.slane %v491, 4
        %v1673 = vsel %vm974, %v541, %v1672
        %v1675 = vunpack.c.l.s4 1983009808
        %v1676 = vunpack.c.0.s8 %v1675
        %v1677 = vperm.slane %v1671, %v1676
        %v1679 = vunpack.c.l.s4 1983009808
        %v1680 = vunpack.c.0.s8 %v1679
        %v1681 = vperm.slane %v1673, %v1680
        %v1682 = vrot.slane %v566, 4
        %v1683 = vsel %vm974, %v1682, %v516
        %v1684 = vrot.slane %v516, 4
        %v1685 = vsel %vm974, %v566, %v1684
        %v1687 = vunpack.c.l.s4 1983009808
        %v1688 = vunpack.c.0.s8 %v1687
        %v1689 = vperm.slane %v1683, %v1688
        %v1691 = vunpack.c.l.s4 1983009808
        %v1692 = vunpack.c.0.s8 %v1691
        %v1693 = vperm.slane %v1685, %v1692
        %v1694 = vrot.slane %v1665, 4
        %v1695 = vsel %vm974, %v1694, %v1653
        %v1696 = vrot.slane %v1653, 4
        %v1697 = vsel %vm974, %v1665, %v1696
        %v1699 = vunpack.c.l.s4 1934713408
        %v1700 = vunpack.c.0.s8 %v1699
        %v1701 = vperm.slane %v1695, %v1700
        %v1703 = vunpack.c.l.s4 1934713408
        %v1704 = vunpack.c.0.s8 %v1703
        %v1705 = vperm.slane %v1697, %v1704
        %v1706 = vrot.slane %v1669, 4
        %v1707 = vsel %vm974, %v1706, %v1657
        %v1708 = vrot.slane %v1657, 4
        %v1709 = vsel %vm974, %v1669, %v1708
        %v1711 = vunpack.c.l.s4 1934713408
        %v1712 = vunpack.c.0.s8 %v1711
        %v1713 = vperm.slane %v1707, %v1712
        %v1715 = vunpack.c.l.s4 1934713408
        %v1716 = vunpack.c.0.s8 %v1715
        %v1717 = vperm.slane %v1709, %v1716
        %v1718 = vrot.slane %v1689, 4
        %v1719 = vsel %vm974, %v1718, %v1677
        %v1720 = vrot.slane %v1677, 4
        %v1721 = vsel %vm974, %v1689, %v1720
        %v1723 = vunpack.c.l.s4 1934713408
        %v1724 = vunpack.c.0.s8 %v1723
        %v1725 = vperm.slane %v1719, %v1724
        %v1727 = vunpack.c.l.s4 1934713408
        %v1728 = vunpack.c.0.s8 %v1727
        %v1729 = vperm.slane %v1721, %v1728
        %v1730 = vrot.slane %v1693, 4
        %v1731 = vsel %vm974, %v1730, %v1681
        %v1732 = vrot.slane %v1681, 4
        %v1733 = vsel %vm974, %v1693, %v1732
        %v1735 = vunpack.c.l.s4 1934713408
        %v1736 = vunpack.c.0.s8 %v1735
        %v1737 = vperm.slane %v1731, %v1736
        %v1739 = vunpack.c.l.s4 1934713408
        %v1740 = vunpack.c.0.s8 %v1739
        %v1741 = vperm.slane %v1733, %v1740
        %v1742 = vrot.slane %v1725, 4
        %v1743 = vsel %vm974, %v1742, %v1701
        %v1744 = vrot.slane %v1701, 4
        %v1745 = vsel %vm974, %v1725, %v1744
        %v1746 = vrot.slane %v1729, 4
        %v1747 = vsel %vm974, %v1746, %v1705
        %v1748 = vrot.slane %v1705, 4
        %v1749 = vsel %vm974, %v1729, %v1748
        %v1750 = vrot.slane %v1737, 4
        %v1751 = vsel %vm974, %v1750, %v1713
        %v1752 = vrot.slane %v1713, 4
        %v1753 = vsel %vm974, %v1737, %v1752
        %v1754 = vrot.slane %v1741, 4
        %v1755 = vsel %vm974, %v1754, %v1717
        %v1756 = vrot.slane %v1717, 4
        %v1757 = vsel %vm974, %v1741, %v1756
        %v1758 = vrot.slane %v447, 4
        %v1759 = vsel %vm974, %v1758, %v397
        %v1760 = vrot.slane %v397, 4
        %v1761 = vsel %vm974, %v447, %v1760
        %v1763 = vunpack.c.l.s4 1983009808
        %v1764 = vunpack.c.0.s8 %v1763
        %v1765 = vperm.slane %v1759, %v1764
        %v1767 = vunpack.c.l.s4 1983009808
        %v1768 = vunpack.c.0.s8 %v1767
        %v1769 = vperm.slane %v1761, %v1768
        %v1770 = vrot.slane %v472, 4
        %v1771 = vsel %vm974, %v1770, %v422
        %v1772 = vrot.slane %v422, 4
        %v1773 = vsel %vm974, %v472, %v1772
        %v1775 = vunpack.c.l.s4 1983009808
        %v1776 = vunpack.c.0.s8 %v1775
        %v1777 = vperm.slane %v1771, %v1776
        %v1779 = vunpack.c.l.s4 1983009808
        %v1780 = vunpack.c.0.s8 %v1779
        %v1781 = vperm.slane %v1773, %v1780
        %v1782 = vrot.slane %v547, 4
        %v1783 = vsel %vm974, %v1782, %v497
        %v1784 = vrot.slane %v497, 4
        %v1785 = vsel %vm974, %v547, %v1784
        %v1787 = vunpack.c.l.s4 1983009808
        %v1788 = vunpack.c.0.s8 %v1787
        %v1789 = vperm.slane %v1783, %v1788
        %v1791 = vunpack.c.l.s4 1983009808
        %v1792 = vunpack.c.0.s8 %v1791
        %v1793 = vperm.slane %v1785, %v1792
        %v1794 = vrot.slane %v572, 4
        %v1795 = vsel %vm974, %v1794, %v522
        %v1796 = vrot.slane %v522, 4
        %v1797 = vsel %vm974, %v572, %v1796
        %v1799 = vunpack.c.l.s4 1983009808
        %v1800 = vunpack.c.0.s8 %v1799
        %v1801 = vperm.slane %v1795, %v1800
        %v1803 = vunpack.c.l.s4 1983009808
        %v1804 = vunpack.c.0.s8 %v1803
        %v1805 = vperm.slane %v1797, %v1804
        %v1806 = vrot.slane %v1777, 4
        %v1807 = vsel %vm974, %v1806, %v1765
        %v1808 = vrot.slane %v1765, 4
        %v1809 = vsel %vm974, %v1777, %v1808
        %v1811 = vunpack.c.l.s4 1934713408
        %v1812 = vunpack.c.0.s8 %v1811
        %v1813 = vperm.slane %v1807, %v1812
        %v1815 = vunpack.c.l.s4 1934713408
        %v1816 = vunpack.c.0.s8 %v1815
        %v1817 = vperm.slane %v1809, %v1816
        %v1818 = vrot.slane %v1781, 4
        %v1819 = vsel %vm974, %v1818, %v1769
        %v1820 = vrot.slane %v1769, 4
        %v1821 = vsel %vm974, %v1781, %v1820
        %v1823 = vunpack.c.l.s4 1934713408
        %v1824 = vunpack.c.0.s8 %v1823
        %v1825 = vperm.slane %v1819, %v1824
        %v1827 = vunpack.c.l.s4 1934713408
        %v1828 = vunpack.c.0.s8 %v1827
        %v1829 = vperm.slane %v1821, %v1828
        %v1830 = vrot.slane %v1801, 4
        %v1831 = vsel %vm974, %v1830, %v1789
        %v1832 = vrot.slane %v1789, 4
        %v1833 = vsel %vm974, %v1801, %v1832
        %v1835 = vunpack.c.l.s4 1934713408
        %v1836 = vunpack.c.0.s8 %v1835
        %v1837 = vperm.slane %v1831, %v1836
        %v1839 = vunpack.c.l.s4 1934713408
        %v1840 = vunpack.c.0.s8 %v1839
        %v1841 = vperm.slane %v1833, %v1840
        %v1842 = vrot.slane %v1805, 4
        %v1843 = vsel %vm974, %v1842, %v1793
        %v1844 = vrot.slane %v1793, 4
        %v1845 = vsel %vm974, %v1805, %v1844
        %v1847 = vunpack.c.l.s4 1934713408
        %v1848 = vunpack.c.0.s8 %v1847
        %v1849 = vperm.slane %v1843, %v1848
        %v1851 = vunpack.c.l.s4 1934713408
        %v1852 = vunpack.c.0.s8 %v1851
        %v1853 = vperm.slane %v1845, %v1852
        %v1854 = vrot.slane %v1837, 4
        %v1855 = vsel %vm974, %v1854, %v1813
        %v1856 = vrot.slane %v1813, 4
        %v1857 = vsel %vm974, %v1837, %v1856
        %v1858 = vrot.slane %v1841, 4
        %v1859 = vsel %vm974, %v1858, %v1817
        %v1860 = vrot.slane %v1817, 4
        %v1861 = vsel %vm974, %v1841, %v1860
        %v1862 = vrot.slane %v1849, 4
        %v1863 = vsel %vm974, %v1862, %v1825
        %v1864 = vrot.slane %v1825, 4
        %v1865 = vsel %vm974, %v1849, %v1864
        %v1866 = vrot.slane %v1853, 4
        %v1867 = vsel %vm974, %v1866, %v1829
        %v1868 = vrot.slane %v1829, 4
        %v1869 = vsel %vm974, %v1853, %v1868
        %v1870 = vrot.slane %v629, 4
        %v1871 = vsel %vm974, %v1870, %v579
        %v1872 = vrot.slane %v579, 4
        %v1873 = vsel %vm974, %v629, %v1872
        %v1875 = vunpack.c.l.s4 1983009808
        %v1876 = vunpack.c.0.s8 %v1875
        %v1877 = vperm.slane %v1871, %v1876
        %v1879 = vunpack.c.l.s4 1983009808
        %v1880 = vunpack.c.0.s8 %v1879
        %v1881 = vperm.slane %v1873, %v1880
        %v1882 = vrot.slane %v654, 4
        %v1883 = vsel %vm974, %v1882, %v604
        %v1884 = vrot.slane %v604, 4
        %v1885 = vsel %vm974, %v654, %v1884
        %v1887 = vunpack.c.l.s4 1983009808
        %v1888 = vunpack.c.0.s8 %v1887
        %v1889 = vperm.slane %v1883, %v1888
        %v1891 = vunpack.c.l.s4 1983009808
        %v1892 = vunpack.c.0.s8 %v1891
        %v1893 = vperm.slane %v1885, %v1892
        %v1894 = vrot.slane %v729, 4
        %v1895 = vsel %vm974, %v1894, %v679
        %v1896 = vrot.slane %v679, 4
        %v1897 = vsel %vm974, %v729, %v1896
        %v1899 = vunpack.c.l.s4 1983009808
        %v1900 = vunpack.c.0.s8 %v1899
        %v1901 = vperm.slane %v1895, %v1900
        %v1903 = vunpack.c.l.s4 1983009808
        %v1904 = vunpack.c.0.s8 %v1903
        %v1905 = vperm.slane %v1897, %v1904
        %v1906 = vrot.slane %v754, 4
        %v1907 = vsel %vm974, %v1906, %v704
        %v1908 = vrot.slane %v704, 4
        %v1909 = vsel %vm974, %v754, %v1908
        %v1911 = vunpack.c.l.s4 1983009808
        %v1912 = vunpack.c.0.s8 %v1911
        %v1913 = vperm.slane %v1907, %v1912
        %v1915 = vunpack.c.l.s4 1983009808
        %v1916 = vunpack.c.0.s8 %v1915
        %v1917 = vperm.slane %v1909, %v1916
        %v1918 = vrot.slane %v1889, 4
        %v1919 = vsel %vm974, %v1918, %v1877
        %v1920 = vrot.slane %v1877, 4
        %v1921 = vsel %vm974, %v1889, %v1920
        %v1923 = vunpack.c.l.s4 1934713408
        %v1924 = vunpack.c.0.s8 %v1923
        %v1925 = vperm.slane %v1919, %v1924
        %v1927 = vunpack.c.l.s4 1934713408
        %v1928 = vunpack.c.0.s8 %v1927
        %v1929 = vperm.slane %v1921, %v1928
        %v1930 = vrot.slane %v1893, 4
        %v1931 = vsel %vm974, %v1930, %v1881
        %v1932 = vrot.slane %v1881, 4
        %v1933 = vsel %vm974, %v1893, %v1932
        %v1935 = vunpack.c.l.s4 1934713408
        %v1936 = vunpack.c.0.s8 %v1935
        %v1937 = vperm.slane %v1931, %v1936
        %v1939 = vunpack.c.l.s4 1934713408
        %v1940 = vunpack.c.0.s8 %v1939
        %v1941 = vperm.slane %v1933, %v1940
        %v1942 = vrot.slane %v1913, 4
        %v1943 = vsel %vm974, %v1942, %v1901
        %v1944 = vrot.slane %v1901, 4
        %v1945 = vsel %vm974, %v1913, %v1944
        %v1947 = vunpack.c.l.s4 1934713408
        %v1948 = vunpack.c.0.s8 %v1947
        %v1949 = vperm.slane %v1943, %v1948
        %v1951 = vunpack.c.l.s4 1934713408
        %v1952 = vunpack.c.0.s8 %v1951
        %v1953 = vperm.slane %v1945, %v1952
        %v1954 = vrot.slane %v1917, 4
        %v1955 = vsel %vm974, %v1954, %v1905
        %v1956 = vrot.slane %v1905, 4
        %v1957 = vsel %vm974, %v1917, %v1956
        %v1959 = vunpack.c.l.s4 1934713408
        %v1960 = vunpack.c.0.s8 %v1959
        %v1961 = vperm.slane %v1955, %v1960
        %v1963 = vunpack.c.l.s4 1934713408
        %v1964 = vunpack.c.0.s8 %v1963
        %v1965 = vperm.slane %v1957, %v1964
        %v1966 = vrot.slane %v1949, 4
        %v1967 = vsel %vm974, %v1966, %v1925
        %v1968 = vrot.slane %v1925, 4
        %v1969 = vsel %vm974, %v1949, %v1968
        %v1970 = vrot.slane %v1953, 4
        %v1971 = vsel %vm974, %v1970, %v1929
        %v1972 = vrot.slane %v1929, 4
        %v1973 = vsel %vm974, %v1953, %v1972
        %v1974 = vrot.slane %v1961, 4
        %v1975 = vsel %vm974, %v1974, %v1937
        %v1976 = vrot.slane %v1937, 4
        %v1977 = vsel %vm974, %v1961, %v1976
        %v1978 = vrot.slane %v1965, 4
        %v1979 = vsel %vm974, %v1978, %v1941
        %v1980 = vrot.slane %v1941, 4
        %v1981 = vsel %vm974, %v1965, %v1980
        %v1982 = vrot.slane %v635, 4
        %v1983 = vsel %vm974, %v1982, %v585
        %v1984 = vrot.slane %v585, 4
        %v1985 = vsel %vm974, %v635, %v1984
        %v1987 = vunpack.c.l.s4 1983009808
        %v1988 = vunpack.c.0.s8 %v1987
        %v1989 = vperm.slane %v1983, %v1988
        %v1991 = vunpack.c.l.s4 1983009808
        %v1992 = vunpack.c.0.s8 %v1991
        %v1993 = vperm.slane %v1985, %v1992
        %v1994 = vrot.slane %v660, 4
        %v1995 = vsel %vm974, %v1994, %v610
        %v1996 = vrot.slane %v610, 4
        %v1997 = vsel %vm974, %v660, %v1996
        %v1999 = vunpack.c.l.s4 1983009808
        %v2000 = vunpack.c.0.s8 %v1999
        %v2001 = vperm.slane %v1995, %v2000
        %v2003 = vunpack.c.l.s4 1983009808
        %v2004 = vunpack.c.0.s8 %v2003
        %v2005 = vperm.slane %v1997, %v2004
        %v2006 = vrot.slane %v735, 4
        %v2007 = vsel %vm974, %v2006, %v685
        %v2008 = vrot.slane %v685, 4
        %v2009 = vsel %vm974, %v735, %v2008
        %v2011 = vunpack.c.l.s4 1983009808
        %v2012 = vunpack.c.0.s8 %v2011
        %v2013 = vperm.slane %v2007, %v2012
        %v2015 = vunpack.c.l.s4 1983009808
        %v2016 = vunpack.c.0.s8 %v2015
        %v2017 = vperm.slane %v2009, %v2016
        %v2018 = vrot.slane %v760, 4
        %v2019 = vsel %vm974, %v2018, %v710
        %v2020 = vrot.slane %v710, 4
        %v2021 = vsel %vm974, %v760, %v2020
        %v2023 = vunpack.c.l.s4 1983009808
        %v2024 = vunpack.c.0.s8 %v2023
        %v2025 = vperm.slane %v2019, %v2024
        %v2027 = vunpack.c.l.s4 1983009808
        %v2028 = vunpack.c.0.s8 %v2027
        %v2029 = vperm.slane %v2021, %v2028
        %v2030 = vrot.slane %v2001, 4
        %v2031 = vsel %vm974, %v2030, %v1989
        %v2032 = vrot.slane %v1989, 4
        %v2033 = vsel %vm974, %v2001, %v2032
        %v2035 = vunpack.c.l.s4 1934713408
        %v2036 = vunpack.c.0.s8 %v2035
        %v2037 = vperm.slane %v2031, %v2036
        %v2039 = vunpack.c.l.s4 1934713408
        %v2040 = vunpack.c.0.s8 %v2039
        %v2041 = vperm.slane %v2033, %v2040
        %v2042 = vrot.slane %v2005, 4
        %v2043 = vsel %vm974, %v2042, %v1993
        %v2044 = vrot.slane %v1993, 4
        %v2045 = vsel %vm974, %v2005, %v2044
        %v2047 = vunpack.c.l.s4 1934713408
        %v2048 = vunpack.c.0.s8 %v2047
        %v2049 = vperm.slane %v2043, %v2048
        %v2051 = vunpack.c.l.s4 1934713408
        %v2052 = vunpack.c.0.s8 %v2051
        %v2053 = vperm.slane %v2045, %v2052
        %v2054 = vrot.slane %v2025, 4
        %v2055 = vsel %vm974, %v2054, %v2013
        %v2056 = vrot.slane %v2013, 4
        %v2057 = vsel %vm974, %v2025, %v2056
        %v2059 = vunpack.c.l.s4 1934713408
        %v2060 = vunpack.c.0.s8 %v2059
        %v2061 = vperm.slane %v2055, %v2060
        %v2063 = vunpack.c.l.s4 1934713408
        %v2064 = vunpack.c.0.s8 %v2063
        %v2065 = vperm.slane %v2057, %v2064
        %v2066 = vrot.slane %v2029, 4
        %v2067 = vsel %vm974, %v2066, %v2017
        %v2068 = vrot.slane %v2017, 4
        %v2069 = vsel %vm974, %v2029, %v2068
        %v2071 = vunpack.c.l.s4 1934713408
        %v2072 = vunpack.c.0.s8 %v2071
        %v2073 = vperm.slane %v2067, %v2072
        %v2075 = vunpack.c.l.s4 1934713408
        %v2076 = vunpack.c.0.s8 %v2075
        %v2077 = vperm.slane %v2069, %v2076
        %v2078 = vrot.slane %v2061, 4
        %v2079 = vsel %vm974, %v2078, %v2037
        %v2080 = vrot.slane %v2037, 4
        %v2081 = vsel %vm974, %v2061, %v2080
        %v2082 = vrot.slane %v2065, 4
        %v2083 = vsel %vm974, %v2082, %v2041
        %v2084 = vrot.slane %v2041, 4
        %v2085 = vsel %vm974, %v2065, %v2084
        %v2086 = vrot.slane %v2073, 4
        %v2087 = vsel %vm974, %v2086, %v2049
        %v2088 = vrot.slane %v2049, 4
        %v2089 = vsel %vm974, %v2073, %v2088
        %v2090 = vrot.slane %v2077, 4
        %v2091 = vsel %vm974, %v2090, %v2053
        %v2092 = vrot.slane %v2053, 4
        %v2093 = vsel %vm974, %v2077, %v2092
        %v2094 = vrot.slane %v641, 4
        %v2095 = vsel %vm974, %v2094, %v591
        %v2096 = vrot.slane %v591, 4
        %v2097 = vsel %vm974, %v641, %v2096
        %v2099 = vunpack.c.l.s4 1983009808
        %v2100 = vunpack.c.0.s8 %v2099
        %v2101 = vperm.slane %v2095, %v2100
        %v2103 = vunpack.c.l.s4 1983009808
        %v2104 = vunpack.c.0.s8 %v2103
        %v2105 = vperm.slane %v2097, %v2104
        %v2106 = vrot.slane %v666, 4
        %v2107 = vsel %vm974, %v2106, %v616
        %v2108 = vrot.slane %v616, 4
        %v2109 = vsel %vm974, %v666, %v2108
        %v2111 = vunpack.c.l.s4 1983009808
        %v2112 = vunpack.c.0.s8 %v2111
        %v2113 = vperm.slane %v2107, %v2112
        %v2115 = vunpack.c.l.s4 1983009808
        %v2116 = vunpack.c.0.s8 %v2115
        %v2117 = vperm.slane %v2109, %v2116
        %v2118 = vrot.slane %v741, 4
        %v2119 = vsel %vm974, %v2118, %v691
        %v2120 = vrot.slane %v691, 4
        %v2121 = vsel %vm974, %v741, %v2120
        %v2123 = vunpack.c.l.s4 1983009808
        %v2124 = vunpack.c.0.s8 %v2123
        %v2125 = vperm.slane %v2119, %v2124
        %v2127 = vunpack.c.l.s4 1983009808
        %v2128 = vunpack.c.0.s8 %v2127
        %v2129 = vperm.slane %v2121, %v2128
        %v2130 = vrot.slane %v766, 4
        %v2131 = vsel %vm974, %v2130, %v716
        %v2132 = vrot.slane %v716, 4
        %v2133 = vsel %vm974, %v766, %v2132
        %v2135 = vunpack.c.l.s4 1983009808
        %v2136 = vunpack.c.0.s8 %v2135
        %v2137 = vperm.slane %v2131, %v2136
        %v2139 = vunpack.c.l.s4 1983009808
        %v2140 = vunpack.c.0.s8 %v2139
        %v2141 = vperm.slane %v2133, %v2140
        %v2142 = vrot.slane %v2113, 4
        %v2143 = vsel %vm974, %v2142, %v2101
        %v2144 = vrot.slane %v2101, 4
        %v2145 = vsel %vm974, %v2113, %v2144
        %v2147 = vunpack.c.l.s4 1934713408
        %v2148 = vunpack.c.0.s8 %v2147
        %v2149 = vperm.slane %v2143, %v2148
        %v2151 = vunpack.c.l.s4 1934713408
        %v2152 = vunpack.c.0.s8 %v2151
        %v2153 = vperm.slane %v2145, %v2152
        %v2154 = vrot.slane %v2117, 4
        %v2155 = vsel %vm974, %v2154, %v2105
        %v2156 = vrot.slane %v2105, 4
        %v2157 = vsel %vm974, %v2117, %v2156
        %v2159 = vunpack.c.l.s4 1934713408
        %v2160 = vunpack.c.0.s8 %v2159
        %v2161 = vperm.slane %v2155, %v2160
        %v2163 = vunpack.c.l.s4 1934713408
        %v2164 = vunpack.c.0.s8 %v2163
        %v2165 = vperm.slane %v2157, %v2164
        %v2166 = vrot.slane %v2137, 4
        %v2167 = vsel %vm974, %v2166, %v2125
        %v2168 = vrot.slane %v2125, 4
        %v2169 = vsel %vm974, %v2137, %v2168
        %v2171 = vunpack.c.l.s4 1934713408
        %v2172 = vunpack.c.0.s8 %v2171
        %v2173 = vperm.slane %v2167, %v2172
        %v2175 = vunpack.c.l.s4 1934713408
        %v2176 = vunpack.c.0.s8 %v2175
        %v2177 = vperm.slane %v2169, %v2176
        %v2178 = vrot.slane %v2141, 4
        %v2179 = vsel %vm974, %v2178, %v2129
        %v2180 = vrot.slane %v2129, 4
        %v2181 = vsel %vm974, %v2141, %v2180
        %v2183 = vunpack.c.l.s4 1934713408
        %v2184 = vunpack.c.0.s8 %v2183
        %v2185 = vperm.slane %v2179, %v2184
        %v2187 = vunpack.c.l.s4 1934713408
        %v2188 = vunpack.c.0.s8 %v2187
        %v2189 = vperm.slane %v2181, %v2188
        %v2190 = vrot.slane %v2173, 4
        %v2191 = vsel %vm974, %v2190, %v2149
        %v2192 = vrot.slane %v2149, 4
        %v2193 = vsel %vm974, %v2173, %v2192
        %v2194 = vrot.slane %v2177, 4
        %v2195 = vsel %vm974, %v2194, %v2153
        %v2196 = vrot.slane %v2153, 4
        %v2197 = vsel %vm974, %v2177, %v2196
        %v2198 = vrot.slane %v2185, 4
        %v2199 = vsel %vm974, %v2198, %v2161
        %v2200 = vrot.slane %v2161, 4
        %v2201 = vsel %vm974, %v2185, %v2200
        %v2202 = vrot.slane %v2189, 4
        %v2203 = vsel %vm974, %v2202, %v2165
        %v2204 = vrot.slane %v2165, 4
        %v2205 = vsel %vm974, %v2189, %v2204
        %v2206 = vrot.slane %v647, 4
        %v2207 = vsel %vm974, %v2206, %v597
        %v2208 = vrot.slane %v597, 4
        %v2209 = vsel %vm974, %v647, %v2208
        %v2211 = vunpack.c.l.s4 1983009808
        %v2212 = vunpack.c.0.s8 %v2211
        %v2213 = vperm.slane %v2207, %v2212
        %v2215 = vunpack.c.l.s4 1983009808
        %v2216 = vunpack.c.0.s8 %v2215
        %v2217 = vperm.slane %v2209, %v2216
        %v2218 = vrot.slane %v672, 4
        %v2219 = vsel %vm974, %v2218, %v622
        %v2220 = vrot.slane %v622, 4
        %v2221 = vsel %vm974, %v672, %v2220
        %v2223 = vunpack.c.l.s4 1983009808
        %v2224 = vunpack.c.0.s8 %v2223
        %v2225 = vperm.slane %v2219, %v2224
        %v2227 = vunpack.c.l.s4 1983009808
        %v2228 = vunpack.c.0.s8 %v2227
        %v2229 = vperm.slane %v2221, %v2228
        %v2230 = vrot.slane %v747, 4
        %v2231 = vsel %vm974, %v2230, %v697
        %v2232 = vrot.slane %v697, 4
        %v2233 = vsel %vm974, %v747, %v2232
        %v2235 = vunpack.c.l.s4 1983009808
        %v2236 = vunpack.c.0.s8 %v2235
        %v2237 = vperm.slane %v2231, %v2236
        %v2239 = vunpack.c.l.s4 1983009808
        %v2240 = vunpack.c.0.s8 %v2239
        %v2241 = vperm.slane %v2233, %v2240
        %v2242 = vrot.slane %v772, 4
        %v2243 = vsel %vm974, %v2242, %v722
        %v2244 = vrot.slane %v722, 4
        %v2245 = vsel %vm974, %v772, %v2244
        %v2247 = vunpack.c.l.s4 1983009808
        %v2248 = vunpack.c.0.s8 %v2247
        %v2249 = vperm.slane %v2243, %v2248
        %v2251 = vunpack.c.l.s4 1983009808
        %v2252 = vunpack.c.0.s8 %v2251
        %v2253 = vperm.slane %v2245, %v2252
        %v2254 = vrot.slane %v2225, 4
        %v2255 = vsel %vm974, %v2254, %v2213
        %v2256 = vrot.slane %v2213, 4
        %v2257 = vsel %vm974, %v2225, %v2256
        %v2259 = vunpack.c.l.s4 1934713408
        %v2260 = vunpack.c.0.s8 %v2259
        %v2261 = vperm.slane %v2255, %v2260
        %v2263 = vunpack.c.l.s4 1934713408
        %v2264 = vunpack.c.0.s8 %v2263
        %v2265 = vperm.slane %v2257, %v2264
        %v2266 = vrot.slane %v2229, 4
        %v2267 = vsel %vm974, %v2266, %v2217
        %v2268 = vrot.slane %v2217, 4
        %v2269 = vsel %vm974, %v2229, %v2268
        %v2271 = vunpack.c.l.s4 1934713408
        %v2272 = vunpack.c.0.s8 %v2271
        %v2273 = vperm.slane %v2267, %v2272
        %v2275 = vunpack.c.l.s4 1934713408
        %v2276 = vunpack.c.0.s8 %v2275
        %v2277 = vperm.slane %v2269, %v2276
        %v2278 = vrot.slane %v2249, 4
        %v2279 = vsel %vm974, %v2278, %v2237
        %v2280 = vrot.slane %v2237, 4
        %v2281 = vsel %vm974, %v2249, %v2280
        %v2283 = vunpack.c.l.s4 1934713408
        %v2284 = vunpack.c.0.s8 %v2283
        %v2285 = vperm.slane %v2279, %v2284
        %v2287 = vunpack.c.l.s4 1934713408
        %v2288 = vunpack.c.0.s8 %v2287
        %v2289 = vperm.slane %v2281, %v2288
        %v2290 = vrot.slane %v2253, 4
        %v2291 = vsel %vm974, %v2290, %v2241
        %v2292 = vrot.slane %v2241, 4
        %v2293 = vsel %vm974, %v2253, %v2292
        %v2295 = vunpack.c.l.s4 1934713408
        %v2296 = vunpack.c.0.s8 %v2295
        %v2297 = vperm.slane %v2291, %v2296
        %v2299 = vunpack.c.l.s4 1934713408
        %v2300 = vunpack.c.0.s8 %v2299
        %v2301 = vperm.slane %v2293, %v2300
        %v2302 = vrot.slane %v2285, 4
        %v2303 = vsel %vm974, %v2302, %v2261
        %v2304 = vrot.slane %v2261, 4
        %v2305 = vsel %vm974, %v2285, %v2304
        %v2306 = vrot.slane %v2289, 4
        %v2307 = vsel %vm974, %v2306, %v2265
        %v2308 = vrot.slane %v2265, 4
        %v2309 = vsel %vm974, %v2289, %v2308
        %v2310 = vrot.slane %v2297, 4
        %v2311 = vsel %vm974, %v2310, %v2273
        %v2312 = vrot.slane %v2273, 4
        %v2313 = vsel %vm974, %v2297, %v2312
        %v2314 = vrot.slane %v2301, 4
        %v2315 = vsel %vm974, %v2314, %v2277
        %v2316 = vrot.slane %v2277, 4
        %v2317 = vsel %vm974, %v2301, %v2316
        %v2318 = vrot.slane %v829, 4
        %v2319 = vsel %vm974, %v2318, %v779
        %v2320 = vrot.slane %v779, 4
        %v2321 = vsel %vm974, %v829, %v2320
        %v2323 = vunpack.c.l.s4 1983009808
        %v2324 = vunpack.c.0.s8 %v2323
        %v2325 = vperm.slane %v2319, %v2324
        %v2327 = vunpack.c.l.s4 1983009808
        %v2328 = vunpack.c.0.s8 %v2327
        %v2329 = vperm.slane %v2321, %v2328
        %v2330 = vrot.slane %v854, 4
        %v2331 = vsel %vm974, %v2330, %v804
        %v2332 = vrot.slane %v804, 4
        %v2333 = vsel %vm974, %v854, %v2332
        %v2335 = vunpack.c.l.s4 1983009808
        %v2336 = vunpack.c.0.s8 %v2335
        %v2337 = vperm.slane %v2331, %v2336
        %v2339 = vunpack.c.l.s4 1983009808
        %v2340 = vunpack.c.0.s8 %v2339
        %v2341 = vperm.slane %v2333, %v2340
        %v2342 = vrot.slane %v929, 4
        %v2343 = vsel %vm974, %v2342, %v879
        %v2344 = vrot.slane %v879, 4
        %v2345 = vsel %vm974, %v929, %v2344
        %v2347 = vunpack.c.l.s4 1983009808
        %v2348 = vunpack.c.0.s8 %v2347
        %v2349 = vperm.slane %v2343, %v2348
        %v2351 = vunpack.c.l.s4 1983009808
        %v2352 = vunpack.c.0.s8 %v2351
        %v2353 = vperm.slane %v2345, %v2352
        %v2354 = vrot.slane %v954, 4
        %v2355 = vsel %vm974, %v2354, %v904
        %v2356 = vrot.slane %v904, 4
        %v2357 = vsel %vm974, %v954, %v2356
        %v2359 = vunpack.c.l.s4 1983009808
        %v2360 = vunpack.c.0.s8 %v2359
        %v2361 = vperm.slane %v2355, %v2360
        %v2363 = vunpack.c.l.s4 1983009808
        %v2364 = vunpack.c.0.s8 %v2363
        %v2365 = vperm.slane %v2357, %v2364
        %v2366 = vrot.slane %v2337, 4
        %v2367 = vsel %vm974, %v2366, %v2325
        %v2368 = vrot.slane %v2325, 4
        %v2369 = vsel %vm974, %v2337, %v2368
        %v2371 = vunpack.c.l.s4 1934713408
        %v2372 = vunpack.c.0.s8 %v2371
        %v2373 = vperm.slane %v2367, %v2372
        %v2375 = vunpack.c.l.s4 1934713408
        %v2376 = vunpack.c.0.s8 %v2375
        %v2377 = vperm.slane %v2369, %v2376
        %v2378 = vrot.slane %v2341, 4
        %v2379 = vsel %vm974, %v2378, %v2329
        %v2380 = vrot.slane %v2329, 4
        %v2381 = vsel %vm974, %v2341, %v2380
        %v2383 = vunpack.c.l.s4 1934713408
        %v2384 = vunpack.c.0.s8 %v2383
        %v2385 = vperm.slane %v2379, %v2384
        %v2387 = vunpack.c.l.s4 1934713408
        %v2388 = vunpack.c.0.s8 %v2387
        %v2389 = vperm.slane %v2381, %v2388
        %v2390 = vrot.slane %v2361, 4
        %v2391 = vsel %vm974, %v2390, %v2349
        %v2392 = vrot.slane %v2349, 4
        %v2393 = vsel %vm974, %v2361, %v2392
        %v2395 = vunpack.c.l.s4 1934713408
        %v2396 = vunpack.c.0.s8 %v2395
        %v2397 = vperm.slane %v2391, %v2396
        %v2399 = vunpack.c.l.s4 1934713408
        %v2400 = vunpack.c.0.s8 %v2399
        %v2401 = vperm.slane %v2393, %v2400
        %v2402 = vrot.slane %v2365, 4
        %v2403 = vsel %vm974, %v2402, %v2353
        %v2404 = vrot.slane %v2353, 4
        %v2405 = vsel %vm974, %v2365, %v2404
        %v2407 = vunpack.c.l.s4 1934713408
        %v2408 = vunpack.c.0.s8 %v2407
        %v2409 = vperm.slane %v2403, %v2408
        %v2411 = vunpack.c.l.s4 1934713408
        %v2412 = vunpack.c.0.s8 %v2411
        %v2413 = vperm.slane %v2405, %v2412
        %v2414 = vrot.slane %v2397, 4
        %v2415 = vsel %vm974, %v2414, %v2373
        %v2416 = vrot.slane %v2373, 4
        %v2417 = vsel %vm974, %v2397, %v2416
        %v2418 = vrot.slane %v2401, 4
        %v2419 = vsel %vm974, %v2418, %v2377
        %v2420 = vrot.slane %v2377, 4
        %v2421 = vsel %vm974, %v2401, %v2420
        %v2422 = vrot.slane %v2409, 4
        %v2423 = vsel %vm974, %v2422, %v2385
        %v2424 = vrot.slane %v2385, 4
        %v2425 = vsel %vm974, %v2409, %v2424
        %v2426 = vrot.slane %v2413, 4
        %v2427 = vsel %vm974, %v2426, %v2389
        %v2428 = vrot.slane %v2389, 4
        %v2429 = vsel %vm974, %v2413, %v2428
        %v2430 = vrot.slane %v835, 4
        %v2431 = vsel %vm974, %v2430, %v785
        %v2432 = vrot.slane %v785, 4
        %v2433 = vsel %vm974, %v835, %v2432
        %v2435 = vunpack.c.l.s4 1983009808
        %v2436 = vunpack.c.0.s8 %v2435
        %v2437 = vperm.slane %v2431, %v2436
        %v2439 = vunpack.c.l.s4 1983009808
        %v2440 = vunpack.c.0.s8 %v2439
        %v2441 = vperm.slane %v2433, %v2440
        %v2442 = vrot.slane %v860, 4
        %v2443 = vsel %vm974, %v2442, %v810
        %v2444 = vrot.slane %v810, 4
        %v2445 = vsel %vm974, %v860, %v2444
        %v2447 = vunpack.c.l.s4 1983009808
        %v2448 = vunpack.c.0.s8 %v2447
        %v2449 = vperm.slane %v2443, %v2448
        %v2451 = vunpack.c.l.s4 1983009808
        %v2452 = vunpack.c.0.s8 %v2451
        %v2453 = vperm.slane %v2445, %v2452
        %v2454 = vrot.slane %v935, 4
        %v2455 = vsel %vm974, %v2454, %v885
        %v2456 = vrot.slane %v885, 4
        %v2457 = vsel %vm974, %v935, %v2456
        %v2459 = vunpack.c.l.s4 1983009808
        %v2460 = vunpack.c.0.s8 %v2459
        %v2461 = vperm.slane %v2455, %v2460
        %v2463 = vunpack.c.l.s4 1983009808
        %v2464 = vunpack.c.0.s8 %v2463
        %v2465 = vperm.slane %v2457, %v2464
        %v2466 = vrot.slane %v960, 4
        %v2467 = vsel %vm974, %v2466, %v910
        %v2468 = vrot.slane %v910, 4
        %v2469 = vsel %vm974, %v960, %v2468
        %v2471 = vunpack.c.l.s4 1983009808
        %v2472 = vunpack.c.0.s8 %v2471
        %v2473 = vperm.slane %v2467, %v2472
        %v2475 = vunpack.c.l.s4 1983009808
        %v2476 = vunpack.c.0.s8 %v2475
        %v2477 = vperm.slane %v2469, %v2476
        %v2478 = vrot.slane %v2449, 4
        %v2479 = vsel %vm974, %v2478, %v2437
        %v2480 = vrot.slane %v2437, 4
        %v2481 = vsel %vm974, %v2449, %v2480
        %v2483 = vunpack.c.l.s4 1934713408
        %v2484 = vunpack.c.0.s8 %v2483
        %v2485 = vperm.slane %v2479, %v2484
        %v2487 = vunpack.c.l.s4 1934713408
        %v2488 = vunpack.c.0.s8 %v2487
        %v2489 = vperm.slane %v2481, %v2488
        %v2490 = vrot.slane %v2453, 4
        %v2491 = vsel %vm974, %v2490, %v2441
        %v2492 = vrot.slane %v2441, 4
        %v2493 = vsel %vm974, %v2453, %v2492
        %v2495 = vunpack.c.l.s4 1934713408
        %v2496 = vunpack.c.0.s8 %v2495
        %v2497 = vperm.slane %v2491, %v2496
        %v2499 = vunpack.c.l.s4 1934713408
        %v2500 = vunpack.c.0.s8 %v2499
        %v2501 = vperm.slane %v2493, %v2500
        %v2502 = vrot.slane %v2473, 4
        %v2503 = vsel %vm974, %v2502, %v2461
        %v2504 = vrot.slane %v2461, 4
        %v2505 = vsel %vm974, %v2473, %v2504
        %v2507 = vunpack.c.l.s4 1934713408
        %v2508 = vunpack.c.0.s8 %v2507
        %v2509 = vperm.slane %v2503, %v2508
        %v2511 = vunpack.c.l.s4 1934713408
        %v2512 = vunpack.c.0.s8 %v2511
        %v2513 = vperm.slane %v2505, %v2512
        %v2514 = vrot.slane %v2477, 4
        %v2515 = vsel %vm974, %v2514, %v2465
        %v2516 = vrot.slane %v2465, 4
        %v2517 = vsel %vm974, %v2477, %v2516
        %v2519 = vunpack.c.l.s4 1934713408
        %v2520 = vunpack.c.0.s8 %v2519
        %v2521 = vperm.slane %v2515, %v2520
        %v2523 = vunpack.c.l.s4 1934713408
        %v2524 = vunpack.c.0.s8 %v2523
        %v2525 = vperm.slane %v2517, %v2524
        %v2526 = vrot.slane %v2509, 4
        %v2527 = vsel %vm974, %v2526, %v2485
        %v2528 = vrot.slane %v2485, 4
        %v2529 = vsel %vm974, %v2509, %v2528
        %v2530 = vrot.slane %v2513, 4
        %v2531 = vsel %vm974, %v2530, %v2489
        %v2532 = vrot.slane %v2489, 4
        %v2533 = vsel %vm974, %v2513, %v2532
        %v2534 = vrot.slane %v2521, 4
        %v2535 = vsel %vm974, %v2534, %v2497
        %v2536 = vrot.slane %v2497, 4
        %v2537 = vsel %vm974, %v2521, %v2536
        %v2538 = vrot.slane %v2525, 4
        %v2539 = vsel %vm974, %v2538, %v2501
        %v2540 = vrot.slane %v2501, 4
        %v2541 = vsel %vm974, %v2525, %v2540
        %v2542 = vrot.slane %v841, 4
        %v2543 = vsel %vm974, %v2542, %v791
        %v2544 = vrot.slane %v791, 4
        %v2545 = vsel %vm974, %v841, %v2544
        %v2547 = vunpack.c.l.s4 1983009808
        %v2548 = vunpack.c.0.s8 %v2547
        %v2549 = vperm.slane %v2543, %v2548
        %v2551 = vunpack.c.l.s4 1983009808
        %v2552 = vunpack.c.0.s8 %v2551
        %v2553 = vperm.slane %v2545, %v2552
        %v2554 = vrot.slane %v866, 4
        %v2555 = vsel %vm974, %v2554, %v816
        %v2556 = vrot.slane %v816, 4
        %v2557 = vsel %vm974, %v866, %v2556
        %v2559 = vunpack.c.l.s4 1983009808
        %v2560 = vunpack.c.0.s8 %v2559
        %v2561 = vperm.slane %v2555, %v2560
        %v2563 = vunpack.c.l.s4 1983009808
        %v2564 = vunpack.c.0.s8 %v2563
        %v2565 = vperm.slane %v2557, %v2564
        %v2566 = vrot.slane %v941, 4
        %v2567 = vsel %vm974, %v2566, %v891
        %v2568 = vrot.slane %v891, 4
        %v2569 = vsel %vm974, %v941, %v2568
        %v2571 = vunpack.c.l.s4 1983009808
        %v2572 = vunpack.c.0.s8 %v2571
        %v2573 = vperm.slane %v2567, %v2572
        %v2575 = vunpack.c.l.s4 1983009808
        %v2576 = vunpack.c.0.s8 %v2575
        %v2577 = vperm.slane %v2569, %v2576
        %v2578 = vrot.slane %v966, 4
        %v2579 = vsel %vm974, %v2578, %v916
        %v2580 = vrot.slane %v916, 4
        %v2581 = vsel %vm974, %v966, %v2580
        %v2583 = vunpack.c.l.s4 1983009808
        %v2584 = vunpack.c.0.s8 %v2583
        %v2585 = vperm.slane %v2579, %v2584
        %v2587 = vunpack.c.l.s4 1983009808
        %v2588 = vunpack.c.0.s8 %v2587
        %v2589 = vperm.slane %v2581, %v2588
        %v2590 = vrot.slane %v2561, 4
        %v2591 = vsel %vm974, %v2590, %v2549
        %v2592 = vrot.slane %v2549, 4
        %v2593 = vsel %vm974, %v2561, %v2592
        %v2595 = vunpack.c.l.s4 1934713408
        %v2596 = vunpack.c.0.s8 %v2595
        %v2597 = vperm.slane %v2591, %v2596
        %v2599 = vunpack.c.l.s4 1934713408
        %v2600 = vunpack.c.0.s8 %v2599
        %v2601 = vperm.slane %v2593, %v2600
        %v2602 = vrot.slane %v2565, 4
        %v2603 = vsel %vm974, %v2602, %v2553
        %v2604 = vrot.slane %v2553, 4
        %v2605 = vsel %vm974, %v2565, %v2604
        %v2607 = vunpack.c.l.s4 1934713408
        %v2608 = vunpack.c.0.s8 %v2607
        %v2609 = vperm.slane %v2603, %v2608
        %v2611 = vunpack.c.l.s4 1934713408
        %v2612 = vunpack.c.0.s8 %v2611
        %v2613 = vperm.slane %v2605, %v2612
        %v2614 = vrot.slane %v2585, 4
        %v2615 = vsel %vm974, %v2614, %v2573
        %v2616 = vrot.slane %v2573, 4
        %v2617 = vsel %vm974, %v2585, %v2616
        %v2619 = vunpack.c.l.s4 1934713408
        %v2620 = vunpack.c.0.s8 %v2619
        %v2621 = vperm.slane %v2615, %v2620
        %v2623 = vunpack.c.l.s4 1934713408
        %v2624 = vunpack.c.0.s8 %v2623
        %v2625 = vperm.slane %v2617, %v2624
        %v2626 = vrot.slane %v2589, 4
        %v2627 = vsel %vm974, %v2626, %v2577
        %v2628 = vrot.slane %v2577, 4
        %v2629 = vsel %vm974, %v2589, %v2628
        %v2631 = vunpack.c.l.s4 1934713408
        %v2632 = vunpack.c.0.s8 %v2631
        %v2633 = vperm.slane %v2627, %v2632
        %v2635 = vunpack.c.l.s4 1934713408
        %v2636 = vunpack.c.0.s8 %v2635
        %v2637 = vperm.slane %v2629, %v2636
        %v2638 = vrot.slane %v2621, 4
        %v2639 = vsel %vm974, %v2638, %v2597
        %v2640 = vrot.slane %v2597, 4
        %v2641 = vsel %vm974, %v2621, %v2640
        %v2642 = vrot.slane %v2625, 4
        %v2643 = vsel %vm974, %v2642, %v2601
        %v2644 = vrot.slane %v2601, 4
        %v2645 = vsel %vm974, %v2625, %v2644
        %v2646 = vrot.slane %v2633, 4
        %v2647 = vsel %vm974, %v2646, %v2609
        %v2648 = vrot.slane %v2609, 4
        %v2649 = vsel %vm974, %v2633, %v2648
        %v2650 = vrot.slane %v2637, 4
        %v2651 = vsel %vm974, %v2650, %v2613
        %v2652 = vrot.slane %v2613, 4
        %v2653 = vsel %vm974, %v2637, %v2652
        %v2654 = vrot.slane %v847, 4
        %v2655 = vsel %vm974, %v2654, %v797
        %v2656 = vrot.slane %v797, 4
        %v2657 = vsel %vm974, %v847, %v2656
        %v2659 = vunpack.c.l.s4 1983009808
        %v2660 = vunpack.c.0.s8 %v2659
        %v2661 = vperm.slane %v2655, %v2660
        %v2663 = vunpack.c.l.s4 1983009808
        %v2664 = vunpack.c.0.s8 %v2663
        %v2665 = vperm.slane %v2657, %v2664
        %v2666 = vrot.slane %v872, 4
        %v2667 = vsel %vm974, %v2666, %v822
        %v2668 = vrot.slane %v822, 4
        %v2669 = vsel %vm974, %v872, %v2668
        %v2671 = vunpack.c.l.s4 1983009808
        %v2672 = vunpack.c.0.s8 %v2671
        %v2673 = vperm.slane %v2667, %v2672
        %v2675 = vunpack.c.l.s4 1983009808
        %v2676 = vunpack.c.0.s8 %v2675
        %v2677 = vperm.slane %v2669, %v2676
        %v2678 = vrot.slane %v947, 4
        %v2679 = vsel %vm974, %v2678, %v897
        %v2680 = vrot.slane %v897, 4
        %v2681 = vsel %vm974, %v947, %v2680
        %v2683 = vunpack.c.l.s4 1983009808
        %v2684 = vunpack.c.0.s8 %v2683
        %v2685 = vperm.slane %v2679, %v2684
        %v2687 = vunpack.c.l.s4 1983009808
        %v2688 = vunpack.c.0.s8 %v2687
        %v2689 = vperm.slane %v2681, %v2688
        %v2690 = vrot.slane %v972, 4
        %v2691 = vsel %vm974, %v2690, %v922
        %v2692 = vrot.slane %v922, 4
        %v2693 = vsel %vm974, %v972, %v2692
        %v2695 = vunpack.c.l.s4 1983009808
        %v2696 = vunpack.c.0.s8 %v2695
        %v2697 = vperm.slane %v2691, %v2696
        %v2699 = vunpack.c.l.s4 1983009808
        %v2700 = vunpack.c.0.s8 %v2699
        %v2701 = vperm.slane %v2693, %v2700
        %v2702 = vrot.slane %v2673, 4
        %v2703 = vsel %vm974, %v2702, %v2661
        %v2704 = vrot.slane %v2661, 4
        %v2705 = vsel %vm974, %v2673, %v2704
        %v2707 = vunpack.c.l.s4 1934713408
        %v2708 = vunpack.c.0.s8 %v2707
        %v2709 = vperm.slane %v2703, %v2708
        %v2711 = vunpack.c.l.s4 1934713408
        %v2712 = vunpack.c.0.s8 %v2711
        %v2713 = vperm.slane %v2705, %v2712
        %v2714 = vrot.slane %v2677, 4
        %v2715 = vsel %vm974, %v2714, %v2665
        %v2716 = vrot.slane %v2665, 4
        %v2717 = vsel %vm974, %v2677, %v2716
        %v2719 = vunpack.c.l.s4 1934713408
        %v2720 = vunpack.c.0.s8 %v2719
        %v2721 = vperm.slane %v2715, %v2720
        %v2723 = vunpack.c.l.s4 1934713408
        %v2724 = vunpack.c.0.s8 %v2723
        %v2725 = vperm.slane %v2717, %v2724
        %v2726 = vrot.slane %v2697, 4
        %v2727 = vsel %vm974, %v2726, %v2685
        %v2728 = vrot.slane %v2685, 4
        %v2729 = vsel %vm974, %v2697, %v2728
        %v2731 = vunpack.c.l.s4 1934713408
        %v2732 = vunpack.c.0.s8 %v2731
        %v2733 = vperm.slane %v2727, %v2732
        %v2735 = vunpack.c.l.s4 1934713408
        %v2736 = vunpack.c.0.s8 %v2735
        %v2737 = vperm.slane %v2729, %v2736
        %v2738 = vrot.slane %v2701, 4
        %v2739 = vsel %vm974, %v2738, %v2689
        %v2740 = vrot.slane %v2689, 4
        %v2741 = vsel %vm974, %v2701, %v2740
        %v2743 = vunpack.c.l.s4 1934713408
        %v2744 = vunpack.c.0.s8 %v2743
        %v2745 = vperm.slane %v2739, %v2744
        %v2747 = vunpack.c.l.s4 1934713408
        %v2748 = vunpack.c.0.s8 %v2747
        %v2749 = vperm.slane %v2741, %v2748
        %v2750 = vrot.slane %v2733, 4
        %v2751 = vsel %vm974, %v2750, %v2709
        %v2752 = vrot.slane %v2709, 4
        %v2753 = vsel %vm974, %v2733, %v2752
        %v2754 = vrot.slane %v2737, 4
        %v2755 = vsel %vm974, %v2754, %v2713
        %v2756 = vrot.slane %v2713, 4
        %v2757 = vsel %vm974, %v2737, %v2756
        %v2758 = vrot.slane %v2745, 4
        %v2759 = vsel %vm974, %v2758, %v2721
        %v2760 = vrot.slane %v2721, 4
        %v2761 = vsel %vm974, %v2745, %v2760
        %v2762 = vrot.slane %v2749, 4
        %v2763 = vsel %vm974, %v2762, %v2725
        %v2764 = vrot.slane %v2725, 4
        %v2765 = vsel %vm974, %v2749, %v2764
        %2770 = vrot.lane.b32.xlu0 %v1073, 2
        %v2771 = vpop.permute.xlu0 %2770
        %2772 = vrot.lane.b32.xlu0 %v1521, 2
        %v2773 = vpop.permute.xlu0 %2772
        %2774 = vrot.lane.b32.xlu0 %v1969, 2
        %v2775 = vpop.permute.xlu0 %2774
        %2776 = vrot.lane.b32.xlu0 %v2417, 2
        %v2777 = vpop.permute.xlu0 %2776
        %2786 = vrot.lane.b32.xlu0 %v1075, 4
        %v2787 = vpop.permute.xlu0 %2786
        %2788 = vrot.lane.b32.xlu0 %v1523, 4
        %v2789 = vpop.permute.xlu0 %2788
        %2790 = vrot.lane.b32.xlu0 %v1971, 4
        %v2791 = vpop.permute.xlu0 %2790
        %2792 = vrot.lane.b32.xlu0 %v2419, 4
        %v2793 = vpop.permute.xlu0 %2792
        %2802 = vrot.lane.b32.xlu0 %v1077, 6
        %v2803 = vpop.permute.xlu0 %2802
        %2804 = vrot.lane.b32.xlu0 %v1525, 6
        %v2805 = vpop.permute.xlu0 %2804
        %2806 = vrot.lane.b32.xlu0 %v1973, 6
        %v2807 = vpop.permute.xlu0 %2806
        %2808 = vrot.lane.b32.xlu0 %v2421, 6
        %v2809 = vpop.permute.xlu0 %2808
        %2818 = vrot.lane.b32.xlu0 %v1079, 8
        %v2819 = vpop.permute.xlu0 %2818
        %2820 = vrot.lane.b32.xlu0 %v1527, 8
        %v2821 = vpop.permute.xlu0 %2820
        %2822 = vrot.lane.b32.xlu0 %v1975, 8
        %v2823 = vpop.permute.xlu0 %2822
        %2824 = vrot.lane.b32.xlu0 %v2423, 8
        %v2825 = vpop.permute.xlu0 %2824
        %2834 = vrot.lane.b32.xlu0 %v1081, 10
        %v2835 = vpop.permute.xlu0 %2834
        %2836 = vrot.lane.b32.xlu0 %v1529, 10
        %v2837 = vpop.permute.xlu0 %2836
        %2838 = vrot.lane.b32.xlu0 %v1977, 10
        %v2839 = vpop.permute.xlu0 %2838
        %2840 = vrot.lane.b32.xlu0 %v2425, 10
        %v2841 = vpop.permute.xlu0 %2840
        %2850 = vrot.lane.b32.xlu0 %v1083, 12
        %v2851 = vpop.permute.xlu0 %2850
        %2852 = vrot.lane.b32.xlu0 %v1531, 12
        %v2853 = vpop.permute.xlu0 %2852
        %2854 = vrot.lane.b32.xlu0 %v1979, 12
        %v2855 = vpop.permute.xlu0 %2854
        %2856 = vrot.lane.b32.xlu0 %v2427, 12
        %v2857 = vpop.permute.xlu0 %2856
        %2866 = vrot.lane.b32.xlu0 %v1085, 14
        %v2867 = vpop.permute.xlu0 %2866
        %2868 = vrot.lane.b32.xlu0 %v1533, 14
        %v2869 = vpop.permute.xlu0 %2868
        %2870 = vrot.lane.b32.xlu0 %v1981, 14
        %v2871 = vpop.permute.xlu0 %2870
        %2872 = vrot.lane.b32.xlu0 %v2429, 14
        %v2873 = vpop.permute.xlu0 %2872
        %2882 = vrot.lane.b32.xlu0 %v1183, 16
        %v2883 = vpop.permute.xlu0 %2882
        %2884 = vrot.lane.b32.xlu0 %v1631, 16
        %v2885 = vpop.permute.xlu0 %2884
        %2886 = vrot.lane.b32.xlu0 %v2079, 16
        %v2887 = vpop.permute.xlu0 %2886
        %2888 = vrot.lane.b32.xlu0 %v2527, 16
        %v2889 = vpop.permute.xlu0 %2888
        %2898 = vrot.lane.b32.xlu0 %v1185, 18
        %v2899 = vpop.permute.xlu0 %2898
        %2900 = vrot.lane.b32.xlu0 %v1633, 18
        %v2901 = vpop.permute.xlu0 %2900
        %2902 = vrot.lane.b32.xlu0 %v2081, 18
        %v2903 = vpop.permute.xlu0 %2902
        %2904 = vrot.lane.b32.xlu0 %v2529, 18
        %v2905 = vpop.permute.xlu0 %2904
        %2914 = vrot.lane.b32.xlu0 %v1187, 20
        %v2915 = vpop.permute.xlu0 %2914
        %2916 = vrot.lane.b32.xlu0 %v1635, 20
        %v2917 = vpop.permute.xlu0 %2916
        %2918 = vrot.lane.b32.xlu0 %v2083, 20
        %v2919 = vpop.permute.xlu0 %2918
        %2920 = vrot.lane.b32.xlu0 %v2531, 20
        %v2921 = vpop.permute.xlu0 %2920
        %2930 = vrot.lane.b32.xlu0 %v1189, 22
        %v2931 = vpop.permute.xlu0 %2930
        %2932 = vrot.lane.b32.xlu0 %v1637, 22
        %v2933 = vpop.permute.xlu0 %2932
        %2934 = vrot.lane.b32.xlu0 %v2085, 22
        %v2935 = vpop.permute.xlu0 %2934
        %2936 = vrot.lane.b32.xlu0 %v2533, 22
        %v2937 = vpop.permute.xlu0 %2936
        %2946 = vrot.lane.b32.xlu0 %v1191, 24
        %v2947 = vpop.permute.xlu0 %2946
        %2948 = vrot.lane.b32.xlu0 %v1639, 24
        %v2949 = vpop.permute.xlu0 %2948
        %2950 = vrot.lane.b32.xlu0 %v2087, 24
        %v2951 = vpop.permute.xlu0 %2950
        %2952 = vrot.lane.b32.xlu0 %v2535, 24
        %v2953 = vpop.permute.xlu0 %2952
        %2962 = vrot.lane.b32.xlu0 %v1193, 26
        %v2963 = vpop.permute.xlu0 %2962
        %2964 = vrot.lane.b32.xlu0 %v1641, 26
        %v2965 = vpop.permute.xlu0 %2964
        %2966 = vrot.lane.b32.xlu0 %v2089, 26
        %v2967 = vpop.permute.xlu0 %2966
        %2968 = vrot.lane.b32.xlu0 %v2537, 26
        %v2969 = vpop.permute.xlu0 %2968
        %2978 = vrot.lane.b32.xlu0 %v1195, 28
        %v2979 = vpop.permute.xlu0 %2978
        %2980 = vrot.lane.b32.xlu0 %v1643, 28
        %v2981 = vpop.permute.xlu0 %2980
        %2982 = vrot.lane.b32.xlu0 %v2091, 28
        %v2983 = vpop.permute.xlu0 %2982
        %2984 = vrot.lane.b32.xlu0 %v2539, 28
        %v2985 = vpop.permute.xlu0 %2984
        %2994 = vrot.lane.b32.xlu0 %v1197, 30
        %v2995 = vpop.permute.xlu0 %2994
        %2996 = vrot.lane.b32.xlu0 %v1645, 30
        %v2997 = vpop.permute.xlu0 %2996
        %2998 = vrot.lane.b32.xlu0 %v2093, 30
        %v2999 = vpop.permute.xlu0 %2998
        %3000 = vrot.lane.b32.xlu0 %v2541, 30
        %v3001 = vpop.permute.xlu0 %3000
        %3010 = vrot.lane.b32.xlu0 %v1295, 32
        %v3011 = vpop.permute.xlu0 %3010
        %3012 = vrot.lane.b32.xlu0 %v1743, 32
        %v3013 = vpop.permute.xlu0 %3012
        %3014 = vrot.lane.b32.xlu0 %v2191, 32
        %v3015 = vpop.permute.xlu0 %3014
        %3016 = vrot.lane.b32.xlu0 %v2639, 32
        %v3017 = vpop.permute.xlu0 %3016
        %3026 = vrot.lane.b32.xlu0 %v1297, 34
        %v3027 = vpop.permute.xlu0 %3026
        %3028 = vrot.lane.b32.xlu0 %v1745, 34
        %v3029 = vpop.permute.xlu0 %3028
        %3030 = vrot.lane.b32.xlu0 %v2193, 34
        %v3031 = vpop.permute.xlu0 %3030
        %3032 = vrot.lane.b32.xlu0 %v2641, 34
        %v3033 = vpop.permute.xlu0 %3032
        %3042 = vrot.lane.b32.xlu0 %v1299, 36
        %v3043 = vpop.permute.xlu0 %3042
        %3044 = vrot.lane.b32.xlu0 %v1747, 36
        %v3045 = vpop.permute.xlu0 %3044
        %3046 = vrot.lane.b32.xlu0 %v2195, 36
        %v3047 = vpop.permute.xlu0 %3046
        %3048 = vrot.lane.b32.xlu0 %v2643, 36
        %v3049 = vpop.permute.xlu0 %3048
        %3058 = vrot.lane.b32.xlu0 %v1301, 38
        %v3059 = vpop.permute.xlu0 %3058
        %3060 = vrot.lane.b32.xlu0 %v1749, 38
        %v3061 = vpop.permute.xlu0 %3060
        %3062 = vrot.lane.b32.xlu0 %v2197, 38
        %v3063 = vpop.permute.xlu0 %3062
        %3064 = vrot.lane.b32.xlu0 %v2645, 38
        %v3065 = vpop.permute.xlu0 %3064
        %3074 = vrot.lane.b32.xlu0 %v1303, 40
        %v3075 = vpop.permute.xlu0 %3074
        %3076 = vrot.lane.b32.xlu0 %v1751, 40
        %v3077 = vpop.permute.xlu0 %3076
        %3078 = vrot.lane.b32.xlu0 %v2199, 40
        %v3079 = vpop.permute.xlu0 %3078
        %3080 = vrot.lane.b32.xlu0 %v2647, 40
        %v3081 = vpop.permute.xlu0 %3080
        %3090 = vrot.lane.b32.xlu0 %v1305, 42
        %v3091 = vpop.permute.xlu0 %3090
        %3092 = vrot.lane.b32.xlu0 %v1753, 42
        %v3093 = vpop.permute.xlu0 %3092
        %3094 = vrot.lane.b32.xlu0 %v2201, 42
        %v3095 = vpop.permute.xlu0 %3094
        %3096 = vrot.lane.b32.xlu0 %v2649, 42
        %v3097 = vpop.permute.xlu0 %3096
        %3106 = vrot.lane.b32.xlu0 %v1307, 44
        %v3107 = vpop.permute.xlu0 %3106
        %3108 = vrot.lane.b32.xlu0 %v1755, 44
        %v3109 = vpop.permute.xlu0 %3108
        %3110 = vrot.lane.b32.xlu0 %v2203, 44
        %v3111 = vpop.permute.xlu0 %3110
        %3112 = vrot.lane.b32.xlu0 %v2651, 44
        %v3113 = vpop.permute.xlu0 %3112
        %3122 = vrot.lane.b32.xlu0 %v1309, 46
        %v3123 = vpop.permute.xlu0 %3122
        %3124 = vrot.lane.b32.xlu0 %v1757, 46
        %v3125 = vpop.permute.xlu0 %3124
        %3126 = vrot.lane.b32.xlu0 %v2205, 46
        %v3127 = vpop.permute.xlu0 %3126
        %3128 = vrot.lane.b32.xlu0 %v2653, 46
        %v3129 = vpop.permute.xlu0 %3128
        %3138 = vrot.lane.b32.xlu0 %v1407, 48
        %v3139 = vpop.permute.xlu0 %3138
        %3140 = vrot.lane.b32.xlu0 %v1855, 48
        %v3141 = vpop.permute.xlu0 %3140
        %3142 = vrot.lane.b32.xlu0 %v2303, 48
        %v3143 = vpop.permute.xlu0 %3142
        %3144 = vrot.lane.b32.xlu0 %v2751, 48
        %v3145 = vpop.permute.xlu0 %3144
        %3154 = vrot.lane.b32.xlu0 %v1409, 50
        %v3155 = vpop.permute.xlu0 %3154
        %3156 = vrot.lane.b32.xlu0 %v1857, 50
        %v3157 = vpop.permute.xlu0 %3156
        %3158 = vrot.lane.b32.xlu0 %v2305, 50
        %v3159 = vpop.permute.xlu0 %3158
        %3160 = vrot.lane.b32.xlu0 %v2753, 50
        %v3161 = vpop.permute.xlu0 %3160
        %3170 = vrot.lane.b32.xlu0 %v1411, 52
        %v3171 = vpop.permute.xlu0 %3170
        %3172 = vrot.lane.b32.xlu0 %v1859, 52
        %v3173 = vpop.permute.xlu0 %3172
        %3174 = vrot.lane.b32.xlu0 %v2307, 52
        %v3175 = vpop.permute.xlu0 %3174
        %3176 = vrot.lane.b32.xlu0 %v2755, 52
        %v3177 = vpop.permute.xlu0 %3176
        %3186 = vrot.lane.b32.xlu0 %v1413, 54
        %v3187 = vpop.permute.xlu0 %3186
        %3188 = vrot.lane.b32.xlu0 %v1861, 54
        %v3189 = vpop.permute.xlu0 %3188
        %3190 = vrot.lane.b32.xlu0 %v2309, 54
        %v3191 = vpop.permute.xlu0 %3190
        %3192 = vrot.lane.b32.xlu0 %v2757, 54
        %v3193 = vpop.permute.xlu0 %3192
        %3202 = vrot.lane.b32.xlu0 %v1415, 56
        %v3203 = vpop.permute.xlu0 %3202
        %3204 = vrot.lane.b32.xlu0 %v1863, 56
        %v3205 = vpop.permute.xlu0 %3204
        %3206 = vrot.lane.b32.xlu0 %v2311, 56
        %v3207 = vpop.permute.xlu0 %3206
        %3208 = vrot.lane.b32.xlu0 %v2759, 56
        %v3209 = vpop.permute.xlu0 %3208
        %3218 = vrot.lane.b32.xlu0 %v1417, 58
        %v3219 = vpop.permute.xlu0 %3218
        %3220 = vrot.lane.b32.xlu0 %v1865, 58
        %v3221 = vpop.permute.xlu0 %3220
        %3222 = vrot.lane.b32.xlu0 %v2313, 58
        %v3223 = vpop.permute.xlu0 %3222
        %3224 = vrot.lane.b32.xlu0 %v2761, 58
        %v3225 = vpop.permute.xlu0 %3224
        %3234 = vrot.lane.b32.xlu0 %v1419, 60
        %v3235 = vpop.permute.xlu0 %3234
        %3236 = vrot.lane.b32.xlu0 %v1867, 60
        %v3237 = vpop.permute.xlu0 %3236
        %3238 = vrot.lane.b32.xlu0 %v2315, 60
        %v3239 = vpop.permute.xlu0 %3238
        %3240 = vrot.lane.b32.xlu0 %v2763, 60
        %v3241 = vpop.permute.xlu0 %3240
        %3250 = vrot.lane.b32.xlu0 %v1421, 62
        %v3251 = vpop.permute.xlu0 %3250
        %3252 = vrot.lane.b32.xlu0 %v1869, 62
        %v3253 = vpop.permute.xlu0 %3252
        %3254 = vrot.lane.b32.xlu0 %v2317, 62
        %v3255 = vpop.permute.xlu0 %3254
        %3256 = vrot.lane.b32.xlu0 %v2765, 62
        %v3257 = vpop.permute.xlu0 %3256
        %vm3262 = vcmask 15360
        %v3263 = vsel %vm3262, %v1071, %v2771
        %v3264 = vsel %vm3262, %v1519, %v2773
        %v3265 = vsel %vm3262, %v1967, %v2775
        %v3266 = vsel %vm3262, %v2415, %v2777
        %vm3267 = vcmask 31744
        %v3268 = vsel %vm3267, %v3263, %v2787
        %v3269 = vsel %vm3267, %v3264, %v2789
        %v3270 = vsel %vm3267, %v3265, %v2791
        %v3271 = vsel %vm3267, %v3266, %v2793
        %vm3272 = vcmask 48128
        %v3273 = vsel %vm3272, %v3268, %v2803
        %v3274 = vsel %vm3272, %v3269, %v2805
        %v3275 = vsel %vm3272, %v3270, %v2807
        %v3276 = vsel %vm3272, %v3271, %v2809
        %vm3277 = vcmask 64512
        %v3278 = vsel %vm3277, %v3273, %v2819
        %v3279 = vsel %vm3277, %v3274, %v2821
        %v3280 = vsel %vm3277, %v3275, %v2823
        %v3281 = vsel %vm3277, %v3276, %v2825
        %vm3282 = vcmask 80896
        %v3283 = vsel %vm3282, %v3278, %v2835
        %v3284 = vsel %vm3282, %v3279, %v2837
        %v3285 = vsel %vm3282, %v3280, %v2839
        %v3286 = vsel %vm3282, %v3281, %v2841
        %vm3287 = vcmask 97280
        %v3288 = vsel %vm3287, %v3283, %v2851
        %v3289 = vsel %vm3287, %v3284, %v2853
        %v3290 = vsel %vm3287, %v3285, %v2855
        %v3291 = vsel %vm3287, %v3286, %v2857
        %vm3292 = vcmask 113664
        %v3293 = vsel %vm3292, %v3288, %v2867
        %v3294 = vsel %vm3292, %v3289, %v2869
        %v3295 = vsel %vm3292, %v3290, %v2871
        %v3296 = vsel %vm3292, %v3291, %v2873
        %vm3297 = vcmask 130048
        %v3298 = vsel %vm3297, %v3293, %v2883
        %v3299 = vsel %vm3297, %v3294, %v2885
        %v3300 = vsel %vm3297, %v3295, %v2887
        %v3301 = vsel %vm3297, %v3296, %v2889
        %vm3302 = vcmask 146432
        %v3303 = vsel %vm3302, %v3298, %v2899
        %v3304 = vsel %vm3302, %v3299, %v2901
        %v3305 = vsel %vm3302, %v3300, %v2903
        %v3306 = vsel %vm3302, %v3301, %v2905
        %vm3307 = vcmask 162816
        %v3308 = vsel %vm3307, %v3303, %v2915
        %v3309 = vsel %vm3307, %v3304, %v2917
        %v3310 = vsel %vm3307, %v3305, %v2919
        %v3311 = vsel %vm3307, %v3306, %v2921
        %vm3312 = vcmask 179200
        %v3313 = vsel %vm3312, %v3308, %v2931
        %v3314 = vsel %vm3312, %v3309, %v2933
        %v3315 = vsel %vm3312, %v3310, %v2935
        %v3316 = vsel %vm3312, %v3311, %v2937
        %vm3317 = vcmask 195584
        %v3318 = vsel %vm3317, %v3313, %v2947
        %v3319 = vsel %vm3317, %v3314, %v2949
        %v3320 = vsel %vm3317, %v3315, %v2951
        %v3321 = vsel %vm3317, %v3316, %v2953
        %vm3322 = vcmask 211968
        %v3323 = vsel %vm3322, %v3318, %v2963
        %v3324 = vsel %vm3322, %v3319, %v2965
        %v3325 = vsel %vm3322, %v3320, %v2967
        %v3326 = vsel %vm3322, %v3321, %v2969
        %vm3327 = vcmask 228352
        %v3328 = vsel %vm3327, %v3323, %v2979
        %v3329 = vsel %vm3327, %v3324, %v2981
        %v3330 = vsel %vm3327, %v3325, %v2983
        %v3331 = vsel %vm3327, %v3326, %v2985
        %vm3332 = vcmask 244736
        %v3333 = vsel %vm3332, %v3328, %v2995
        %v3334 = vsel %vm3332, %v3329, %v2997
        %v3335 = vsel %vm3332, %v3330, %v2999
        %v3336 = vsel %vm3332, %v3331, %v3001
        %vm3337 = vcmask 261120
        %v3338 = vsel %vm3337, %v3333, %v3011
        %v3339 = vsel %vm3337, %v3334, %v3013
        %v3340 = vsel %vm3337, %v3335, %v3015
        %v3341 = vsel %vm3337, %v3336, %v3017
        %vm3342 = vcmask 277504
        %v3343 = vsel %vm3342, %v3338, %v3027
        %v3344 = vsel %vm3342, %v3339, %v3029
        %v3345 = vsel %vm3342, %v3340, %v3031
        %v3346 = vsel %vm3342, %v3341, %v3033
        %vm3347 = vcmask 293888
        %v3348 = vsel %vm3347, %v3343, %v3043
        %v3349 = vsel %vm3347, %v3344, %v3045
        %v3350 = vsel %vm3347, %v3345, %v3047
        %v3351 = vsel %vm3347, %v3346, %v3049
        %vm3352 = vcmask 310272
        %v3353 = vsel %vm3352, %v3348, %v3059
        %v3354 = vsel %vm3352, %v3349, %v3061
        %v3355 = vsel %vm3352, %v3350, %v3063
        %v3356 = vsel %vm3352, %v3351, %v3065
        %vm3357 = vcmask 326656
        %v3358 = vsel %vm3357, %v3353, %v3075
        %v3359 = vsel %vm3357, %v3354, %v3077
        %v3360 = vsel %vm3357, %v3355, %v3079
        %v3361 = vsel %vm3357, %v3356, %v3081
        %vm3362 = vcmask 343040
        %v3363 = vsel %vm3362, %v3358, %v3091
        %v3364 = vsel %vm3362, %v3359, %v3093
        %v3365 = vsel %vm3362, %v3360, %v3095
        %v3366 = vsel %vm3362, %v3361, %v3097
        %vm3367 = vcmask 359424
        %v3368 = vsel %vm3367, %v3363, %v3107
        %v3369 = vsel %vm3367, %v3364, %v3109
        %v3370 = vsel %vm3367, %v3365, %v3111
        %v3371 = vsel %vm3367, %v3366, %v3113
        %vm3372 = vcmask 375808
        %v3373 = vsel %vm3372, %v3368, %v3123
        %v3374 = vsel %vm3372, %v3369, %v3125
        %v3375 = vsel %vm3372, %v3370, %v3127
        %v3376 = vsel %vm3372, %v3371, %v3129
        %vm3377 = vcmask 392192
        %v3378 = vsel %vm3377, %v3373, %v3139
        %v3379 = vsel %vm3377, %v3374, %v3141
        %v3380 = vsel %vm3377, %v3375, %v3143
        %v3381 = vsel %vm3377, %v3376, %v3145
        %vm3382 = vcmask 408576
        %v3383 = vsel %vm3382, %v3378, %v3155
        %v3384 = vsel %vm3382, %v3379, %v3157
        %v3385 = vsel %vm3382, %v3380, %v3159
        %v3386 = vsel %vm3382, %v3381, %v3161
        %vm3387 = vcmask 424960
        %v3388 = vsel %vm3387, %v3383, %v3171
        %v3389 = vsel %vm3387, %v3384, %v3173
        %v3390 = vsel %vm3387, %v3385, %v3175
        %v3391 = vsel %vm3387, %v3386, %v3177
        %vm3392 = vcmask 441344
        %v3393 = vsel %vm3392, %v3388, %v3187
        %v3394 = vsel %vm3392, %v3389, %v3189
        %v3395 = vsel %vm3392, %v3390, %v3191
        %v3396 = vsel %vm3392, %v3391, %v3193
        %vm3397 = vcmask 457728
        %v3398 = vsel %vm3397, %v3393, %v3203
        %v3399 = vsel %vm3397, %v3394, %v3205
        %v3400 = vsel %vm3397, %v3395, %v3207
        %v3401 = vsel %vm3397, %v3396, %v3209
        %vm3402 = vcmask 474112
        %v3403 = vsel %vm3402, %v3398, %v3219
        %v3404 = vsel %vm3402, %v3399, %v3221
        %v3405 = vsel %vm3402, %v3400, %v3223
        %v3406 = vsel %vm3402, %v3401, %v3225
        %vm3407 = vcmask 490496
        %v3408 = vsel %vm3407, %v3403, %v3235
        %v3409 = vsel %vm3407, %v3404, %v3237
        %v3410 = vsel %vm3407, %v3405, %v3239
        %v3411 = vsel %vm3407, %v3406, %v3241
        %vm3412 = vcmask 506880
        %v3413 = vsel %vm3412, %v3408, %v3251
        %v3414 = vsel %vm3412, %v3409, %v3253
        %v3415 = vsel %vm3412, %v3410, %v3255
        %v3416 = vsel %vm3412, %v3411, %v3257
        %v3417 = vlaneseq
        %v3418 = vand.u32 %v3417, 127
        %vm3419 = vcmp.lt.s32.totalorder %v3418, 0
        %v3420 = vsub.s32 0, %v3418
        %v3421 = vsel %vm3419, %v3420, %v3418
        %v3422 = vshrl.u32 %v3421, 1
        %v3423 = vand.u32 %v3421, 1
        %v3424 = vsub.s32 0, %v3423
        %v3425 = vsel %vm3419, %v3424, %v3423
        %vm3426 = vcmp.ne.s32.totalorder %v3425, 0
        %vm3427 = vcmp.lt.s32.totalorder %v3425, 0
        %vm3428 = vmand %vm3427, %vm3426
        %v3429 = vadd.s32 %v3425, 2
        %v3430 = vsel %vm3428, %v3429, %v3425
        %vm3431 = vcmp.eq.s32.totalorder %v3430, 0
        %v3432 = vsel %vm3431, %v3413, 0.0
        %v3433 = vsel %vm3431, %v3414, 0.0
        %v3434 = vsel %vm3431, %v3415, 0.0
        %v3435 = vsel %vm3431, %v3416, 0.0
        %3440 = vrot.lane.b32.xlu0 %v3432, 32
        %v3441 = vpop.permute.xlu0 %3440
        %3442 = vrot.lane.b32.xlu0 %v3433, 32
        %v3443 = vpop.permute.xlu0 %3442
        %3444 = vrot.lane.b32.xlu0 %v3434, 32
        %v3445 = vpop.permute.xlu0 %3444
        %3446 = vrot.lane.b32.xlu0 %v3435, 32
        %v3447 = vpop.permute.xlu0 %3446
        %v3452 = vsel %vm3337, %v3432, 0.0
        %v3453 = vsel %vm3337, %v3433, 0.0
        %v3454 = vsel %vm3337, %v3434, 0.0
        %v3455 = vsel %vm3337, %v3435, 0.0
        %vm3456 = vcmask 523264
        %v3457 = vsel %vm3456, %v3452, %v3441
        %v3458 = vsel %vm3456, %v3453, %v3443
        %v3459 = vsel %vm3456, %v3454, %v3445
        %v3460 = vsel %vm3456, %v3455, %v3447
        %vm3461 = vcmask 785408
        %v3462 = vsel %vm3461, %v3457, 0.0
        %v3463 = vsel %vm3461, %v3458, 0.0
        %v3464 = vsel %vm3461, %v3459, 0.0
        %v3465 = vsel %vm3461, %v3460, 0.0
        %3466 = vst [vmem:[%s166] sm:$0xff] %v3462
        %3467 = vst [vmem:[%s166 + $0x8] sm:$0xff] %v3463
        %3468 = vst [vmem:[%s166 + $0x10] sm:$0xff] %v3464
        %3469 = vst [vmem:[%s166 + $0x18] sm:$0xff] %v3465
        %s3470 = sand.u32 %s79, 1
        %s3471 = scalar_lea.sflag [#allocation4], %s3470
        %s3472 = sand.u32 %s79, 1
        %s3473 = smul.addr %s3472, 32
        %s3474 = scalar_lea.vmem [#allocation5], %s3473
        // Predicated region
        $region29: #{tpu_custom_call.1} parent=23 // pred_check
          %p3475 = pneg %p89
        $region30: #{tpu_custom_call.1} parent=23 // pred_check_branch
          %3477 = sbr.rel (%p3475) target = $region32
        $region31: #{tpu_custom_call.1} parent=23 // pred_region
          %s3478 = smul.u32 4, %s24
          %3480 = vsyncadd %s3471, 0
          %s3481 = sadd.s32 %s25, %s3478
          %s3482 = smul.addr %s23, 4
          %s3483 = sadd.s32 %s3481, %s3482
          %s3484 = smul.addr %s3483, 8
          %s3485 = scalar_lea.hbm %s1, %s3484
          %s3486 = sshll.u32 %s3474, 4
          %s3487 = int_to_ptr.vmem [resolvable:$true] %s3486
          %s3488 = sshll.u32 %s3485, 4
          %s3489 = int_to_ptr.hbm [resolvable:$true] %s3488
          %3494 = dma.vmem_to_hbm [thread:$0]  %s3487, 512, %s3489, %s3471, 128, 128, 8
        $region32: #{tpu_custom_call.1} parent=23 // pred_fallthru
          _
      $region24: #{tpu_custom_call.1} parent=5 // pred_fallthru
        _
      %p3495 = scmp.le.s32.totalorder 2, %s13
      // Predicated region
      $region33: #{tpu_custom_call.1} parent=5 // pred_check
        %p3496 = pneg %p3495
      $region34: #{tpu_custom_call.1} parent=5 // pred_check_branch
        %3498 = sbr.rel (%p3496) target = $region36
      $region35: #{tpu_custom_call.1} parent=5 // pred_region
        %s3499 = ssub.s32 %s13, 2
        // Predicated region
        $region37: #{tpu_custom_call.1} parent=35 // pred_check
          %p3500 = pneg %p95
        $region38: #{tpu_custom_call.1} parent=35 // pred_check_branch
          %3502 = sbr.rel (%p3500) target = $region40
        $region39: #{tpu_custom_call.1} parent=35 // pred_region
          %s3503 = sand.u32 %s80, 1
          %s3504 = scalar_lea.sflag [#allocation4], %s3503
          %s3505 = sand.u32 %s80, 1
          %s3506 = smul.addr %s3505, 32
          %s3507 = scalar_lea.vmem [#allocation5], %s3506
          %3509 = dma.done %s3504, 512
        $region40: #{tpu_custom_call.1} parent=35 // pred_fallthru
          _
      $region36: #{tpu_custom_call.1} parent=5 // pred_fallthru
        _
    $region6: #{tpu_custom_call.1} parent=1 // loop_footer
      %s17 = sadd.s32 1, %s13
    $region7: #{tpu_custom_call.1} parent=1 // loop_footer_branch
      %12 = sbr.rel target = $region3
    $region8: #{tpu_custom_call.1} parent=1 // loop_exit
      _
    %3510 = vsyncpa [#allocation3], 1
    %s3511 = scalar_lea.sflag [#allocation3], 1
    %3512 = vsyncpa %s3511, 1
    %3513 = vsyncpa [#allocation4], 1
    %s3514 = scalar_lea.sflag [#allocation4], 1
    %3515 = vsyncpa %s3514, 1

</llo_original>
